<compile_context>
chip_gen: v5e
topology: v5e:2x2
jax: 0.10.0
libtpu: 0.0.40
codegen_flags: <defaults>
</compile_context>

<pallas_src>
import math

import numpy as np
import jax
import jax.numpy as jnp
from jax import lax
from jax.experimental import pallas as pl
from jax.experimental.pallas import tpu as pltpu

# ---- small hyperparameters consistent with TFEQMy.__init__ (scaled down) ----
B = 2            # batch
C_IN = 4         # input_dim (channels)
T_SEQ = 16       # seq_len
D_MODEL = 32     # embed_dim
N_HEAD = 4       # num_heads
HEAD_DIM = D_MODEL // N_HEAD
FF_DIM = 16      # ff_hidden_dim
MLP_DIM = 16     # mlp_output_dim
LN_EPS = 1e-5
ATTN_SCALE = 1.0 / math.sqrt(HEAD_DIM)
BT = B * T_SEQ           # flattened (batch*time) rows
HBT = N_HEAD * BT        # head-stacked rows


# ------------------- packed-slab layouts (shared by init + kernel) -------------------

def _pad8(n):
    return ((n + 7) // 8) * 8


def _make_layout(items):
    layout, off = {}, 0
    for name, rows in items:
        layout[name] = (off, rows)
        off += _pad8(rows)          # 8-align every component (clean sublane slices)
    return layout, off


# lane-width 32 (= D_MODEL) slab: weights producing D lanes + LN params + attention consts
_L32, _N32 = _make_layout([
    ('w_emb', C_IN), ('pe_be', BT),
    ('w_o', D_MODEL), ('b_o', 1), ('g1', 1), ('bt1', 1),
    ('w2', FF_DIM), ('b2', 1), ('g2', 1), ('bt2', 1),
    ('w_d1', D_MODEL), ('b_d1', 1),
    ('bsum', B), ('attn_bias', HBT), ('hmask', HBT),
])
# lane-width 96 (= 3D) slab: fused QKV projection
_L96, _N96 = _make_layout([('w_qkv', D_MODEL), ('b_qkv', 1)])
# lane-width 16 (= FF/MLP) slab
_L16, _N16 = _make_layout([('w1', D_MODEL), ('b1', 1), ('fold', T_SEQ * MLP_DIM),
                           ('b_m1f', 1), ('w_m2', MLP_DIM), ('b_m2', 1)])
# lane-width 256 (= T*M) slab: pre-folded MLP-head weight + its block selection mask
_L256, _N256 = _make_layout([('w_head', D_MODEL), ('blk_mask', BT)])


def _take(ref, layout, name, width=None):
    off, rows = layout[name]
    v = ref[off:off + rows, :]
    return v if width is None else v[:, :width]


# ------------------------- fused Pallas kernel -------------------------

def _tfeq_fused_kernel(x_ref, s32_ref, s96_ref, s16_ref, s256_ref, out_ref):
    f32 = jnp.float32

    def t32(name):
        return _take(s32_ref, _L32, name)

    def t96(name):
        return _take(s96_ref, _L96, name)

    def t16(name, width=None):
        return _take(s16_ref, _L16, name, width)

    def t256(name):
        return _take(s256_ref, _L256, name)

    def layernorm(h, g, b):
        mu = jnp.mean(h, axis=-1, keepdims=True)
        hc = h - mu
        var = jnp.mean(hc * hc, axis=-1, keepdims=True)
        return hc * lax.rsqrt(var + LN_EPS) * g + b

    # ---- embedding: NCT->NTC permute folded into a transposed-lhs contraction ----
    w_emb = t32('w_emb')                                   # (C, D)
    hb = [lax.dot_general(x_ref[b], w_emb, (((0,), (0,)), ((), ())),
                          preferred_element_type=f32)       # x_b^T @ W_emb  -> (T, D)
          for b in range(B)]
    h = jnp.concatenate(hb, axis=0) + t32('pe_be')          # (B*T, D); PE already has b_emb

    # ---- fused QKV projection; q/k/v are static lane slices of one matmul ----
    qkv = jnp.dot(h, t96('w_qkv'), preferred_element_type=f32) + t96('b_qkv')
    q = qkv[:, 0:D_MODEL]
    k = qkv[:, D_MODEL:2 * D_MODEL]
    v = qkv[:, 2 * D_MODEL:3 * D_MODEL]

    # ---- head-stacked multi-head attention: 1 score matmul, 1 softmax, 1 PV ----
    hmask = t32('hmask')                                    # (H*B*T, D) 0/1 head-lane mask
    qs = jnp.concatenate([q] * N_HEAD, axis=0) * hmask      # stacked per-head queries
    s = lax.dot_general(qs, k, (((1,), (1,)), ((), ())),
                        preferred_element_type=f32)          # (H*B*T, B*T)
    s = s * ATTN_SCALE + t32('attn_bias')                    # -1e9 across batch elements
    s = s - jnp.max(s, axis=-1, keepdims=True)
    e = jnp.exp(s)
    p = e * pl.reciprocal(jnp.sum(e, axis=-1, keepdims=True), approx=False)
    pvs = jnp.dot(p, v, preferred_element_type=f32) * hmask  # (H*B*T, D), head lanes kept
    attn = pvs[0:BT]                                         # fold head blocks (disjoint lanes)
    for hd in range(1, N_HEAD):
        attn = attn + pvs[hd * BT:(hd + 1) * BT]
    a = jnp.dot(attn, t32('w_o'), preferred_element_type=f32) + t32('b_o')

    # ---- encoder block (post-norm residuals + FFN) ----
    h = layernorm(h + a, t32('g1'), t32('bt1'))
    f = jnp.maximum(jnp.dot(h, t16('w1', FF_DIM), preferred_element_type=f32)
                    + t16('b1', FF_DIM), 0.0)
    h = layernorm(h + jnp.dot(f, t32('w2'), preferred_element_type=f32) + t32('b2'),
                  t32('g2'), t32('bt2'))

    # ---- decoder fc1 + (fc2 pre-folded into the flattened MLP head) ----
    d = jnp.maximum(jnp.dot(h, t32('w_d1'), preferred_element_type=f32) + t32('b_d1'), 0.0)
    g2w = jnp.dot(d, t256('w_head'), preferred_element_type=f32)          # (B*T, T*M)
    red = jnp.dot(t32('bsum'), g2w * t256('blk_mask'),
                  preferred_element_type=f32)                             # (B, T*M)
    m1 = jnp.dot(red, t16('fold', MLP_DIM), preferred_element_type=f32) + t16('b_m1f', MLP_DIM)
    m1 = jnp.maximum(m1, 0.0)                                             # ReLU
    z = jnp.dot(m1, t16('w_m2', 1), preferred_element_type=f32) + t16('b_m2', 1)
    out_ref[...] = 1.0 / (1.0 + jnp.exp(-z))                              # Sigmoid -> (B, 1)


# ------------------------- wrapper -------------------------

@jax.jit
def tfeq_forward(x, params):
    """x: (B, C_IN, T_SEQ) float32 -> (B, 1) sigmoid outputs (TFEQMy.forward)."""
    args = (x, params['s32'], params['s96'], params['s16'], params['s256'])
    return pl.pallas_call(
        _tfeq_fused_kernel,
        out_shape=jax.ShapeDtypeStruct((x.shape[0], 1), jnp.float32),
        in_specs=[pl.BlockSpec(memory_space=pltpu.MemorySpace.VMEM) for _ in args],
        out_specs=pl.BlockSpec(memory_space=pltpu.MemorySpace.VMEM),
    )(*args)


# --------------- deterministic parameters, pre-folds & packed slabs ---------------

def _sinusoidal_pe(seq_len, d_model):
    # exactly PositionalEncoding.__init__
    pe = np.zeros((seq_len, d_model), dtype=np.float32)
    position = np.arange(0, seq_len, dtype=np.float32)[:, None]
    div_term = np.exp(np.arange(0, d_model, 2, dtype=np.float32)
                      * (-math.log(10000.0) / d_model))
    pe[:, 0::2] = np.sin(position * div_term)
    pe[:, 1::2] = np.cos(position * div_term)
    return pe


def init_params(key):
    keys = jax.random.split(key, 18)

    def w(k, shape, scale=0.1):
        return np.asarray(scale * jax.random.normal(k, shape, dtype=jnp.float32))

    # weights stored as (in, out): forward computes x @ W + b (== torch x @ W.T + b)
    w_emb = w(keys[0], (C_IN, D_MODEL));          b_emb = w(keys[1], (1, D_MODEL))
    w_qkv = w(keys[2], (D_MODEL, 3 * D_MODEL));   b_qkv = w(keys[3], (1, 3 * D_MODEL))
    w_o = w(keys[4], (D_MODEL, D_MODEL));         b_o = w(keys[5], (1, D_MODEL))
    g1 = np.ones((1, D_MODEL), np.float32);       bt1 = np.zeros((1, D_MODEL), np.float32)
    w1 = w(keys[6], (D_MODEL, FF_DIM));           b1 = w(keys[7], (1, FF_DIM))
    w2 = w(keys[8], (FF_DIM, D_MODEL));           b2 = w(keys[9], (1, D_MODEL))
    g2 = np.ones((1, D_MODEL), np.float32);       bt2 = np.zeros((1, D_MODEL), np.float32)
    w_d1 = w(keys[10], (D_MODEL, D_MODEL));       b_d1 = w(keys[11], (1, D_MODEL))
    w_d2 = w(keys[12], (D_MODEL, C_IN));          b_d2 = w(keys[13], (1, C_IN))
    w_m1 = w(keys[14], (T_SEQ * C_IN, MLP_DIM));  b_m1 = w(keys[15], (1, MLP_DIM))
    w_m2 = w(keys[16], (MLP_DIM, 1));             b_m2 = w(keys[17], (1, 1))

    pe = _sinusoidal_pe(T_SEQ, D_MODEL)

    # ---- init-time pre-folds (pure algebra, forward semantics unchanged) ----
    # positional encoding pre-tiled over batch rows, with the embedding bias folded in
    pe_be = np.tile(pe, (B, 1)) + b_emb                                       # (B*T, D)
    # MLP layer-1 weight re-laid out so rows index channel c: w_m1f[c, t*M+m] = W[t*C+c, m]
    w_m1f = np.reshape(np.transpose(np.reshape(w_m1, (T_SEQ, C_IN, MLP_DIM)), (1, 0, 2)),
                       (C_IN, T_SEQ * MLP_DIM))
    # decoder_fc2 folded into the flattened MLP layer (no nonlinearity in between)
    w_head = w_d2 @ w_m1f                                                     # (D, T*M)
    b_m1f = b_m1 + np.sum(np.reshape(b_d2 @ w_m1f, (T_SEQ, MLP_DIM)), axis=0, keepdims=True)

    # ---- constants consumed by the fused kernel ----
    rows = np.arange(BT)
    same = (rows[:, None] // T_SEQ) == (rows[None, :] // T_SEQ)
    attn_bias = np.tile(np.where(same, 0.0, -1e9).astype(np.float32), (N_HEAD, 1))  # (H*B*T, B*T)
    lanes = np.arange(D_MODEL)
    hmask = np.concatenate(
        [np.repeat(((lanes // HEAD_DIM) == hd).astype(np.float32)[None, :], BT, axis=0)
         for hd in range(N_HEAD)], axis=0)                                          # (H*B*T, D)
    cols = np.arange(T_SEQ * MLP_DIM)
    blk_mask = ((cols[None, :] // MLP_DIM) == (rows[:, None] % T_SEQ)).astype(np.float32)
    fold = ((cols[:, None] % MLP_DIM) == np.arange(MLP_DIM)[None, :]).astype(np.float32)
    bsum = ((rows[None, :] // T_SEQ) == np.arange(B)[:, None]).astype(np.float32)

    # ---- pack everything into 4 lane-width-grouped slabs ----
    def pack(layout, total_rows, width, tensors):
        slab = np.zeros((total_rows, width), np.float32)
        for name, arr in tensors.items():
            off, nrows = layout[name]
            a = np.asarray(arr, np.float32)
            assert a.shape[0] == nrows and a.shape[1] <= width, (name, a.shape)
            slab[off:off + nrows, :a.shape[1]] = a
        return jnp.asarray(slab)

    params = {
        's32': pack(_L32, _N32, D_MODEL, dict(
            w_emb=w_emb, pe_be=pe_be, w_o=w_o, b_o=b_o, g1=g1, bt1=bt1,
            w2=w2, b2=b2, g2=g2, bt2=bt2, w_d1=w_d1, b_d1=b_d1,
            bsum=bsum, attn_bias=attn_bias, hmask=hmask)),
        's96': pack(_L96, _N96, 3 * D_MODEL, dict(w_qkv=w_qkv, b_qkv=b_qkv)),
        's16': pack(_L16, _N16, max(FF_DIM, MLP_DIM), dict(
            w1=w1, b1=b1, fold=fold, b_m1f=b_m1f, w_m2=w_m2, b_m2=b_m2)),
        's256': pack(_L256, _N256, T_SEQ * MLP_DIM, dict(w_head=w_head, blk_mask=blk_mask)),
    }
    raw = {k: jnp.asarray(v) for k, v in dict(
        w_emb=w_emb, b_emb=b_emb, pe=pe, w_qkv=w_qkv, b_qkv=b_qkv, w_o=w_o, b_o=b_o,
        g1=g1, bt1=bt1, w1=w1, b1=b1, w2=w2, b2=b2, g2=g2, bt2=bt2,
        w_d1=w_d1, b_d1=b_d1, w_d2=w_d2, b_d2=b_d2,
        w_m1=w_m1, b_m1=b_m1, w_m2=w_m2, b_m2=b_m2).items()}
    return params, raw


# ---------------- plain-JAX reference (mirrors the PyTorch module) ----------------

def reference_forward(x, r):
    def ln(h, g, b):
        mu = jnp.mean(h, -1, keepdims=True)
        var = jnp.mean((h - mu) ** 2, -1, keepdims=True)
        return (h - mu) / jnp.sqrt(var + LN_EPS) * g + b

    h = jnp.transpose(x, (0, 2, 1)) @ r['w_emb'] + r['b_emb'] + r['pe'][None]
    qkv = h @ r['w_qkv'] + r['b_qkv']
    q, k, v = jnp.split(qkv, 3, axis=-1)

    def heads(t):
        return t.reshape(B, T_SEQ, N_HEAD, HEAD_DIM).transpose(0, 2, 1, 3)

    qh, kh, vh = heads(q), heads(k), heads(v)
    s = jnp.einsum('bhqd,bhkd->bhqk', qh, kh) * ATTN_SCALE
    p = jax.nn.softmax(s, axis=-1)
    o = jnp.einsum('bhqk,bhkd->bhqd', p, vh).transpose(0, 2, 1, 3).reshape(B, T_SEQ, D_MODEL)
    a = o @ r['w_o'] + r['b_o']
    h = ln(h + a, r['g1'], r['bt1'])
    f = jax.nn.relu(h @ r['w1'] + r['b1'])
    h = ln(h + f @ r['w2'] + r['b2'], r['g2'], r['bt2'])
    d = jax.nn.relu(h @ r['w_d1'] + r['b_d1'])
    d2 = d @ r['w_d2'] + r['b_d2']
    m1 = jax.nn.relu(d2.reshape(B, T_SEQ * C_IN) @ r['w_m1'] + r['b_m1'])
    return jax.nn.sigmoid(m1 @ r['w_m2'] + r['b_m2'])


if __name__ == "__main__":
    key = jax.random.PRNGKey(0)
    pkey, xkey = jax.random.split(key)
    params, raw = init_params(pkey)
    x = jax.random.normal(xkey, (B, C_IN, T_SEQ), dtype=jnp.float32)

    out = jax.block_until_ready(tfeq_forward(x, params))

    assert out.shape == (B, 1), out.shape
    assert bool(jnp.all(jnp.isfinite(out)))
    assert bool(jnp.all((out >= 0.0) & (out <= 1.0)))   # sigmoid output range

    with jax.default_matmul_precision('highest'):
        ref = jax.block_until_ready(reference_forward(x, raw))
    assert float(jnp.max(jnp.abs(out - ref))) < 2e-2, (out, ref)

    print("KERNEL_OK")
</pallas_src>

<mosaic_0001>
module attributes {stable_mosaic.version = 11 : i64} {
  func.func @_tfeq_fused_kernel(%arg0: memref<2x4x16xf32, #tpu.memory_space<vmem>>, %arg1: memref<440x32xf32, #tpu.memory_space<vmem>>, %arg2: memref<40x96xf32, #tpu.memory_space<vmem>>, %arg3: memref<328x16xf32, #tpu.memory_space<vmem>>, %arg4: memref<64x256xf32, #tpu.memory_space<vmem>>, %arg5: memref<2x1xf32, #tpu.memory_space<vmem>>) attributes {dimension_semantics = [], scalar_prefetch = 0 : i64, scratch_operands = 0 : i64, tpu.core_type = #tpu.core_type<tc>} {
    %c0 = arith.constant 0 : index
    %c0_0 = arith.constant 0 : index
    %0 = vector.load %arg1[%c0, %c0_0] : memref<440x32xf32, #tpu.memory_space<vmem>>, vector<4x32xf32>
    %c0_1 = arith.constant 0 : index
    %c0_2 = arith.constant 0 : index
    %c0_3 = arith.constant 0 : index
    %1 = vector.load %arg0[%c0_1, %c0_2, %c0_3] : memref<2x4x16xf32, #tpu.memory_space<vmem>>, vector<1x4x16xf32>
    %2 = vector.shape_cast %1 : vector<1x4x16xf32> to vector<4x16xf32>
    %cst = arith.constant dense<0.000000e+00> : vector<16x32xf32>
    %3 = tpu.matmul %2, %0, %cst {dimension_numbers = #tpu.dot_dimension_numbers<[0], [0], [1], [1], [0, 1, 1, 1], [], []>} : vector<4x16xf32>, vector<4x32xf32>, vector<16x32xf32> -> vector<16x32xf32>
    %c1 = arith.constant 1 : index
    %c0_4 = arith.constant 0 : index
    %c0_5 = arith.constant 0 : index
    %4 = vector.load %arg0[%c1, %c0_4, %c0_5] : memref<2x4x16xf32, #tpu.memory_space<vmem>>, vector<1x4x16xf32>
    %5 = vector.shape_cast %4 : vector<1x4x16xf32> to vector<4x16xf32>
    %cst_6 = arith.constant dense<0.000000e+00> : vector<16x32xf32>
    %6 = tpu.matmul %5, %0, %cst_6 {dimension_numbers = #tpu.dot_dimension_numbers<[0], [0], [1], [1], [0, 1, 1, 1], [], []>} : vector<4x16xf32>, vector<4x32xf32>, vector<16x32xf32> -> vector<16x32xf32>
    %7 = tpu.concatenate %3, %6 in 0 : vector<16x32xf32>, vector<16x32xf32> -> vector<32x32xf32>
    %c8 = arith.constant 8 : index
    %c0_7 = arith.constant 0 : index
    %8 = vector.load %arg1[%c8, %c0_7] : memref<440x32xf32, #tpu.memory_space<vmem>>, vector<32x32xf32>
    %9 = arith.addf %7, %8 : vector<32x32xf32>
    %c0_8 = arith.constant 0 : index
    %c0_9 = arith.constant 0 : index
    %10 = vector.load %arg2[%c0_8, %c0_9] : memref<40x96xf32, #tpu.memory_space<vmem>>, vector<32x96xf32>
    %cst_10 = arith.constant dense<0.000000e+00> : vector<32x96xf32>
    %11 = tpu.matmul %9, %10, %cst_10 {dimension_numbers = #tpu.dot_dimension_numbers<[1], [0], [0], [1], [0, 0, 1, 1], [], []>} : vector<32x32xf32>, vector<32x96xf32>, vector<32x96xf32> -> vector<32x96xf32>
    %c32 = arith.constant 32 : index
    %c0_11 = arith.constant 0 : index
    %12 = vector.load %arg2[%c32, %c0_11] : memref<40x96xf32, #tpu.memory_space<vmem>>, vector<1x96xf32>
    %13 = vector.broadcast %12 : vector<1x96xf32> to vector<32x96xf32>
    %14 = arith.addf %11, %13 : vector<32x96xf32>
    %15 = vector.extract_strided_slice %14 {offsets = [0, 0], sizes = [32, 32], strides = [1, 1]} : vector<32x96xf32> to vector<32x32xf32>
    %16 = vector.extract_strided_slice %14 {offsets = [0, 32], sizes = [32, 32], strides = [1, 1]} : vector<32x96xf32> to vector<32x32xf32>
    %17 = vector.extract_strided_slice %14 {offsets = [0, 64], sizes = [32, 32], strides = [1, 1]} : vector<32x96xf32> to vector<32x32xf32>
    %c312 = arith.constant 312 : index
    %c0_12 = arith.constant 0 : index
    %18 = vector.load %arg1[%c312, %c0_12] : memref<440x32xf32, #tpu.memory_space<vmem>>, vector<128x32xf32>
    %19 = tpu.concatenate %15, %15, %15, %15 in 0 : vector<32x32xf32>, vector<32x32xf32>, vector<32x32xf32>, vector<32x32xf32> -> vector<128x32xf32>
    %20 = arith.mulf %19, %18 : vector<128x32xf32>
    %cst_13 = arith.constant dense<0.000000e+00> : vector<128x32xf32>
    %21 = tpu.matmul %20, %16, %cst_13 {dimension_numbers = #tpu.dot_dimension_numbers<[1], [1], [0], [0], [0, 0, 1, 0], [], []>} : vector<128x32xf32>, vector<32x32xf32>, vector<128x32xf32> -> vector<128x32xf32>
    %cst_14 = arith.constant 0.353553385 : f32
    %22 = vector.broadcast %cst_14 : f32 to vector<128x32xf32>
    %23 = arith.mulf %21, %22 : vector<128x32xf32>
    %c184 = arith.constant 184 : index
    %c0_15 = arith.constant 0 : index
    %24 = vector.load %arg1[%c184, %c0_15] : memref<440x32xf32, #tpu.memory_space<vmem>>, vector<128x32xf32>
    %25 = arith.addf %23, %24 : vector<128x32xf32>
    %cst_16 = arith.constant dense<0xFF800000> : vector<128xf32>
    %26 = vector.multi_reduction <maximumf>, %25, %cst_16 [1] : vector<128x32xf32> to vector<128xf32>
    %27 = vector.shape_cast %26 : vector<128xf32> to vector<128x1xf32>
    %28 = vector.broadcast %27 : vector<128x1xf32> to vector<128x32xf32>
    %29 = arith.subf %25, %28 : vector<128x32xf32>
    %30 = math.exp %29 : vector<128x32xf32>
    %cst_17 = arith.constant dense<0.000000e+00> : vector<128xf32>
    %31 = vector.multi_reduction <add>, %30, %cst_17 [1] : vector<128x32xf32> to vector<128xf32>
    %32 = vector.shape_cast %31 : vector<128xf32> to vector<128x1xf32>
    %33 = tpu.reciprocal %32 : vector<128x1xf32> -> vector<128x1xf32>
    %34 = vector.broadcast %33 : vector<128x1xf32> to vector<128x32xf32>
    %35 = arith.mulf %30, %34 : vector<128x32xf32>
    %cst_18 = arith.constant dense<0.000000e+00> : vector<128x32xf32>
    %36 = tpu.matmul %35, %17, %cst_18 {dimension_numbers = #tpu.dot_dimension_numbers<[1], [0], [0], [1], [0, 0, 1, 1], [], []>} : vector<128x32xf32>, vector<32x32xf32>, vector<128x32xf32> -> vector<128x32xf32>
    %37 = arith.mulf %36, %18 : vector<128x32xf32>
    %38 = vector.extract_strided_slice %37 {offsets = [0, 0], sizes = [32, 32], strides = [1, 1]} : vector<128x32xf32> to vector<32x32xf32>
    %39 = vector.extract_strided_slice %37 {offsets = [32, 0], sizes = [32, 32], strides = [1, 1]} : vector<128x32xf32> to vector<32x32xf32>
    %40 = arith.addf %38, %39 : vector<32x32xf32>
    %41 = vector.extract_strided_slice %37 {offsets = [64, 0], sizes = [32, 32], strides = [1, 1]} : vector<128x32xf32> to vector<32x32xf32>
    %42 = arith.addf %40, %41 : vector<32x32xf32>
    %43 = vector.extract_strided_slice %37 {offsets = [96, 0], sizes = [32, 32], strides = [1, 1]} : vector<128x32xf32> to vector<32x32xf32>
    %44 = arith.addf %42, %43 : vector<32x32xf32>
    %c40 = arith.constant 40 : index
    %c0_19 = arith.constant 0 : index
    %45 = vector.load %arg1[%c40, %c0_19] : memref<440x32xf32, #tpu.memory_space<vmem>>, vector<32x32xf32>
    %cst_20 = arith.constant dense<0.000000e+00> : vector<32x32xf32>
    %46 = tpu.matmul %44, %45, %cst_20 {dimension_numbers = #tpu.dot_dimension_numbers<[1], [0], [0], [1], [0, 0, 1, 1], [], []>} : vector<32x32xf32>, vector<32x32xf32>, vector<32x32xf32> -> vector<32x32xf32>
    %c72 = arith.constant 72 : index
    %c0_21 = arith.constant 0 : index
    %47 = vector.load %arg1[%c72, %c0_21] : memref<440x32xf32, #tpu.memory_space<vmem>>, vector<1x32xf32>
    %48 = vector.broadcast %47 : vector<1x32xf32> to vector<32x32xf32>
    %49 = arith.addf %46, %48 : vector<32x32xf32>
    %50 = arith.addf %9, %49 : vector<32x32xf32>
    %c80 = arith.constant 80 : index
    %c0_22 = arith.constant 0 : index
    %51 = vector.load %arg1[%c80, %c0_22] : memref<440x32xf32, #tpu.memory_space<vmem>>, vector<1x32xf32>
    %c88 = arith.constant 88 : index
    %c0_23 = arith.constant 0 : index
    %52 = vector.load %arg1[%c88, %c0_23] : memref<440x32xf32, #tpu.memory_space<vmem>>, vector<1x32xf32>
    %cst_24 = arith.constant dense<0.000000e+00> : vector<32xf32>
    %53 = vector.multi_reduction <add>, %50, %cst_24 [1] : vector<32x32xf32> to vector<32xf32>
    %54 = vector.shape_cast %53 : vector<32xf32> to vector<32x1xf32>
    %cst_25 = arith.constant 3.200000e+01 : f32
    %55 = vector.broadcast %cst_25 : f32 to vector<32x1xf32>
    %56 = arith.divf %54, %55 : vector<32x1xf32>
    %57 = vector.broadcast %56 : vector<32x1xf32> to vector<32x32xf32>
    %58 = arith.subf %50, %57 : vector<32x32xf32>
    %59 = arith.mulf %58, %58 : vector<32x32xf32>
    %cst_26 = arith.constant dense<0.000000e+00> : vector<32xf32>
    %60 = vector.multi_reduction <add>, %59, %cst_26 [1] : vector<32x32xf32> to vector<32xf32>
    %61 = vector.shape_cast %60 : vector<32xf32> to vector<32x1xf32>
    %cst_27 = arith.constant 3.200000e+01 : f32
    %62 = vector.broadcast %cst_27 : f32 to vector<32x1xf32>
    %63 = arith.divf %61, %62 : vector<32x1xf32>
    %cst_28 = arith.constant 9.99999974E-6 : f32
    %64 = vector.broadcast %cst_28 : f32 to vector<32x1xf32>
    %65 = arith.addf %63, %64 : vector<32x1xf32>
    %66 = math.rsqrt %65 : vector<32x1xf32>
    %67 = vector.broadcast %66 : vector<32x1xf32> to vector<32x32xf32>
    %68 = arith.mulf %58, %67 : vector<32x32xf32>
    %69 = vector.broadcast %51 : vector<1x32xf32> to vector<32x32xf32>
    %70 = arith.mulf %68, %69 : vector<32x32xf32>
    %71 = vector.broadcast %52 : vector<1x32xf32> to vector<32x32xf32>
    %72 = arith.addf %70, %71 : vector<32x32xf32>
    %c0_29 = arith.constant 0 : index
    %c0_30 = arith.constant 0 : index
    %73 = vector.load %arg3[%c0_29, %c0_30] : memref<328x16xf32, #tpu.memory_space<vmem>>, vector<32x16xf32>
    %cst_31 = arith.constant dense<0.000000e+00> : vector<32x16xf32>
    %74 = tpu.matmul %72, %73, %cst_31 {dimension_numbers = #tpu.dot_dimension_numbers<[1], [0], [0], [1], [0, 0, 1, 1], [], []>} : vector<32x32xf32>, vector<32x16xf32>, vector<32x16xf32> -> vector<32x16xf32>
    %c32_32 = arith.constant 32 : index
    %c0_33 = arith.constant 0 : index
    %75 = vector.load %arg3[%c32_32, %c0_33] : memref<328x16xf32, #tpu.memory_space<vmem>>, vector<1x16xf32>
    %76 = vector.broadcast %75 : vector<1x16xf32> to vector<32x16xf32>
    %77 = arith.addf %74, %76 : vector<32x16xf32>
    %cst_34 = arith.constant 0.000000e+00 : f32
    %78 = vector.broadcast %cst_34 : f32 to vector<32x16xf32>
    %79 = arith.maximumf %77, %78 : vector<32x16xf32>
    %c96 = arith.constant 96 : index
    %c0_35 = arith.constant 0 : index
    %80 = vector.load %arg1[%c96, %c0_35] : memref<440x32xf32, #tpu.memory_space<vmem>>, vector<16x32xf32>
    %cst_36 = arith.constant dense<0.000000e+00> : vector<32x32xf32>
    %81 = tpu.matmul %79, %80, %cst_36 {dimension_numbers = #tpu.dot_dimension_numbers<[1], [0], [0], [1], [0, 0, 1, 1], [], []>} : vector<32x16xf32>, vector<16x32xf32>, vector<32x32xf32> -> vector<32x32xf32>
    %82 = arith.addf %72, %81 : vector<32x32xf32>
    %c112 = arith.constant 112 : index
    %c0_37 = arith.constant 0 : index
    %83 = vector.load %arg1[%c112, %c0_37] : memref<440x32xf32, #tpu.memory_space<vmem>>, vector<1x32xf32>
    %84 = vector.broadcast %83 : vector<1x32xf32> to vector<32x32xf32>
    %85 = arith.addf %82, %84 : vector<32x32xf32>
    %c120 = arith.constant 120 : index
    %c0_38 = arith.constant 0 : index
    %86 = vector.load %arg1[%c120, %c0_38] : memref<440x32xf32, #tpu.memory_space<vmem>>, vector<1x32xf32>
    %c128 = arith.constant 128 : index
    %c0_39 = arith.constant 0 : index
    %87 = vector.load %arg1[%c128, %c0_39] : memref<440x32xf32, #tpu.memory_space<vmem>>, vector<1x32xf32>
    %cst_40 = arith.constant dense<0.000000e+00> : vector<32xf32>
    %88 = vector.multi_reduction <add>, %85, %cst_40 [1] : vector<32x32xf32> to vector<32xf32>
    %89 = vector.shape_cast %88 : vector<32xf32> to vector<32x1xf32>
    %cst_41 = arith.constant 3.200000e+01 : f32
    %90 = vector.broadcast %cst_41 : f32 to vector<32x1xf32>
    %91 = arith.divf %89, %90 : vector<32x1xf32>
    %92 = vector.broadcast %91 : vector<32x1xf32> to vector<32x32xf32>
    %93 = arith.subf %85, %92 : vector<32x32xf32>
    %94 = arith.mulf %93, %93 : vector<32x32xf32>
    %cst_42 = arith.constant dense<0.000000e+00> : vector<32xf32>
    %95 = vector.multi_reduction <add>, %94, %cst_42 [1] : vector<32x32xf32> to vector<32xf32>
    %96 = vector.shape_cast %95 : vector<32xf32> to vector<32x1xf32>
    %cst_43 = arith.constant 3.200000e+01 : f32
    %97 = vector.broadcast %cst_43 : f32 to vector<32x1xf32>
    %98 = arith.divf %96, %97 : vector<32x1xf32>
    %cst_44 = arith.constant 9.99999974E-6 : f32
    %99 = vector.broadcast %cst_44 : f32 to vector<32x1xf32>
    %100 = arith.addf %98, %99 : vector<32x1xf32>
    %101 = math.rsqrt %100 : vector<32x1xf32>
    %102 = vector.broadcast %101 : vector<32x1xf32> to vector<32x32xf32>
    %103 = arith.mulf %93, %102 : vector<32x32xf32>
    %104 = vector.broadcast %86 : vector<1x32xf32> to vector<32x32xf32>
    %105 = arith.mulf %103, %104 : vector<32x32xf32>
    %106 = vector.broadcast %87 : vector<1x32xf32> to vector<32x32xf32>
    %107 = arith.addf %105, %106 : vector<32x32xf32>
    %c136 = arith.constant 136 : index
    %c0_45 = arith.constant 0 : index
    %108 = vector.load %arg1[%c136, %c0_45] : memref<440x32xf32, #tpu.memory_space<vmem>>, vector<32x32xf32>
    %cst_46 = arith.constant dense<0.000000e+00> : vector<32x32xf32>
    %109 = tpu.matmul %107, %108, %cst_46 {dimension_numbers = #tpu.dot_dimension_numbers<[1], [0], [0], [1], [0, 0, 1, 1], [], []>} : vector<32x32xf32>, vector<32x32xf32>, vector<32x32xf32> -> vector<32x32xf32>
    %c168 = arith.constant 168 : index
    %c0_47 = arith.constant 0 : index
    %110 = vector.load %arg1[%c168, %c0_47] : memref<440x32xf32, #tpu.memory_space<vmem>>, vector<1x32xf32>
    %111 = vector.broadcast %110 : vector<1x32xf32> to vector<32x32xf32>
    %112 = arith.addf %109, %111 : vector<32x32xf32>
    %cst_48 = arith.constant 0.000000e+00 : f32
    %113 = vector.broadcast %cst_48 : f32 to vector<32x32xf32>
    %114 = arith.maximumf %112, %113 : vector<32x32xf32>
    %c0_49 = arith.constant 0 : index
    %c0_50 = arith.constant 0 : index
    %115 = vector.load %arg4[%c0_49, %c0_50] : memref<64x256xf32, #tpu.memory_space<vmem>>, vector<32x256xf32>
    %cst_51 = arith.constant dense<0.000000e+00> : vector<32x256xf32>
    %116 = tpu.matmul %114, %115, %cst_51 {dimension_numbers = #tpu.dot_dimension_numbers<[1], [0], [0], [1], [0, 0, 1, 1], [], []>} : vector<32x32xf32>, vector<32x256xf32>, vector<32x256xf32> -> vector<32x256xf32>
    %c176 = arith.constant 176 : index
    %c0_52 = arith.constant 0 : index
    %117 = vector.load %arg1[%c176, %c0_52] : memref<440x32xf32, #tpu.memory_space<vmem>>, vector<2x32xf32>
    %c32_53 = arith.constant 32 : index
    %c0_54 = arith.constant 0 : index
    %118 = vector.load %arg4[%c32_53, %c0_54] : memref<64x256xf32, #tpu.memory_space<vmem>>, vector<32x256xf32>
    %119 = arith.mulf %116, %118 : vector<32x256xf32>
    %cst_55 = arith.constant dense<0.000000e+00> : vector<2x256xf32>
    %120 = tpu.matmul %117, %119, %cst_55 {dimension_numbers = #tpu.dot_dimension_numbers<[1], [0], [0], [1], [0, 0, 1, 1], [], []>} : vector<2x32xf32>, vector<32x256xf32>, vector<2x256xf32> -> vector<2x256xf32>
    %c40_56 = arith.constant 40 : index
    %c0_57 = arith.constant 0 : index
    %121 = vector.load %arg3[%c40_56, %c0_57] : memref<328x16xf32, #tpu.memory_space<vmem>>, vector<256x16xf32>
    %cst_58 = arith.constant dense<0.000000e+00> : vector<2x16xf32>
    %122 = tpu.matmul %120, %121, %cst_58 {dimension_numbers = #tpu.dot_dimension_numbers<[1], [0], [0], [1], [0, 0, 1, 1], [], []>} : vector<2x256xf32>, vector<256x16xf32>, vector<2x16xf32> -> vector<2x16xf32>
    %c296 = arith.constant 296 : index
    %c0_59 = arith.constant 0 : index
    %123 = vector.load %arg3[%c296, %c0_59] : memref<328x16xf32, #tpu.memory_space<vmem>>, vector<1x16xf32>
    %124 = vector.broadcast %123 : vector<1x16xf32> to vector<2x16xf32>
    %125 = arith.addf %122, %124 : vector<2x16xf32>
    %cst_60 = arith.constant 0.000000e+00 : f32
    %126 = vector.broadcast %cst_60 : f32 to vector<2x16xf32>
    %127 = arith.maximumf %125, %126 : vector<2x16xf32>
    %c304 = arith.constant 304 : index
    %c0_61 = arith.constant 0 : index
    %128 = vector.load %arg3[%c304, %c0_61] : memref<328x16xf32, #tpu.memory_space<vmem>>, vector<16x16xf32>
    %129 = vector.extract_strided_slice %128 {offsets = [0, 0], sizes = [16, 1], strides = [1, 1]} : vector<16x16xf32> to vector<16x1xf32>
    %cst_62 = arith.constant dense<0.000000e+00> : vector<2x1xf32>
    %130 = tpu.matmul %127, %129, %cst_62 {dimension_numbers = #tpu.dot_dimension_numbers<[1], [0], [0], [1], [0, 0, 1, 1], [], []>} : vector<2x16xf32>, vector<16x1xf32>, vector<2x1xf32> -> vector<2x1xf32>
    %c320 = arith.constant 320 : index
    %c0_63 = arith.constant 0 : index
    %131 = vector.load %arg3[%c320, %c0_63] : memref<328x16xf32, #tpu.memory_space<vmem>>, vector<1x16xf32>
    %132 = vector.extract_strided_slice %131 {offsets = [0, 0], sizes = [1, 1], strides = [1, 1]} : vector<1x16xf32> to vector<1x1xf32>
    %133 = vector.broadcast %132 : vector<1x1xf32> to vector<2x1xf32>
    %134 = arith.addf %130, %133 : vector<2x1xf32>
    %cst_64 = arith.constant 0.000000e+00 : f32
    %135 = vector.broadcast %cst_64 : f32 to vector<2x1xf32>
    %136 = arith.subf %135, %134 : vector<2x1xf32>
    %137 = math.exp %136 : vector<2x1xf32>
    %cst_65 = arith.constant 1.000000e+00 : f32
    %138 = vector.broadcast %cst_65 : f32 to vector<2x1xf32>
    %139 = arith.addf %138, %137 : vector<2x1xf32>
    %cst_66 = arith.constant 1.000000e+00 : f32
    %140 = vector.broadcast %cst_66 : f32 to vector<2x1xf32>
    %141 = arith.divf %140, %139 : vector<2x1xf32>
    %c0_67 = arith.constant 0 : index
    %c0_68 = arith.constant 0 : index
    %142 = vector.load %arg5[%c0_67, %c0_68] : memref<2x1xf32, #tpu.memory_space<vmem>>, vector<2x1xf32>
    tpu.vector_store %arg5[%c0_67, %c0_68], %141 {strides = array<i32>} : memref<2x1xf32, #tpu.memory_space<vmem>>, vector<2x1xf32>,
    return
  }
}

</mosaic_0001>

<llo_original>
// kernel: tfeq_forward.1
$region0: #{tfeq_forward.1}
  #allocation0 [shape = 'u32[]', space=smem, size = 0x4, offset = 0x4, fixed_abs, tag = 'smem constant byte address 0x4 - core index']
  #allocation1 [shape = 'u32[72,128]{1,0:T(1,128)}', space=vmem, size = 0x9000, scoped, tag = 'internal scratch']
  %s0 = inlined_call_operand.vmem [shape: f32[2,4,16], index: 0, kind: input, shape index: {}]
  %s1 = inlined_call_operand.vmem [shape: f32[440,32], index: 1, kind: input, shape index: {}]
  %s2 = inlined_call_operand.vmem [shape: f32[40,96], index: 2, kind: input, shape index: {}]
  %s3 = inlined_call_operand.vmem [shape: f32[328,16], index: 3, kind: input, shape index: {}]
  %s4 = inlined_call_operand.vmem [shape: f32[64,256], index: 4, kind: input, shape index: {}]
  %s5 = inlined_call_operand.vmem [shape: f32[2,1], index: 5, kind: output, shape index: {}]
  %s6 = sld [smem:[#allocation0]]
  $region30: #{tfeq_forward.1} parent=0
    _
  %s8 = ssub.s32 1, %s6
  %s9 = scalar_select 0, %s8, %s6
  // Predicated region
  $region2: #{tfeq_forward.1} parent=0 // pred_check
    _
  $region3: #{tfeq_forward.1} parent=0 // pred_check_branch
    %11 = sbr.rel (0) target = $region5
  $region4: #{tfeq_forward.1} parent=0 // pred_region
    _
  $region5: #{tfeq_forward.1} parent=0 // pred_fallthru
    _
  // Predicated region
  $region6: #{tfeq_forward.1} parent=0 // pred_check
    _
  $region7: #{tfeq_forward.1} parent=0 // pred_check_branch
    %13 = sbr.rel (0) target = $region9
  $region8: #{tfeq_forward.1} parent=0 // pred_region
    _
  $region9: #{tfeq_forward.1} parent=0 // pred_fallthru
    _
  // Predicated region
  $region10: #{tfeq_forward.1} parent=0 // pred_check
    _
  $region11: #{tfeq_forward.1} parent=0 // pred_check_branch
    %15 = sbr.rel (0) target = $region13
  $region12: #{tfeq_forward.1} parent=0 // pred_region
    _
  $region13: #{tfeq_forward.1} parent=0 // pred_fallthru
    _
  // Predicated region
  $region14: #{tfeq_forward.1} parent=0 // pred_check
    _
  $region15: #{tfeq_forward.1} parent=0 // pred_check_branch
    %17 = sbr.rel (0) target = $region17
  $region16: #{tfeq_forward.1} parent=0 // pred_region
    _
  $region17: #{tfeq_forward.1} parent=0 // pred_fallthru
    _
  // Predicated region
  $region18: #{tfeq_forward.1} parent=0 // pred_check
    _
  $region19: #{tfeq_forward.1} parent=0 // pred_check_branch
    %19 = sbr.rel (0) target = $region21
  $region20: #{tfeq_forward.1} parent=0 // pred_region
    _
  $region21: #{tfeq_forward.1} parent=0 // pred_fallthru
    _
  %v20 = vld [vmem:[%s1] sm:$0xf]
  %v21 = vld [vmem:[%s0] sm:$0xf]
  %22 = vxpose.xlu0.b32.start [1/16] %v21, 128
  %23 = vxpose.xlu0.b32.cont [2/16] 0.0, 128
  %24 = vxpose.xlu0.b32.cont [3/16] 0.0, 128
  %25 = vxpose.xlu0.b32.cont [4/16] 0.0, 128
  %26 = vxpose.xlu0.b32.cont [5/16] 0.0, 128
  %27 = vxpose.xlu0.b32.cont [6/16] 0.0, 128
  %28 = vxpose.xlu0.b32.cont [7/16] 0.0, 128
  %29 = vxpose.xlu0.b32.cont [8/16] 0.0, 128
  %30 = vxpose.xlu0.b32.cont [9/16] 0.0, 128
  %31 = vxpose.xlu0.b32.cont [10/16] 0.0, 128
  %32 = vxpose.xlu0.b32.cont [11/16] 0.0, 128
  %33 = vxpose.xlu0.b32.cont [12/16] 0.0, 128
  %34 = vxpose.xlu0.b32.cont [13/16] 0.0, 128
  %35 = vxpose.xlu0.b32.cont [14/16] 0.0, 128
  %36 = vxpose.xlu0.b32.cont [15/16] 0.0, 128
  %37 = vxpose.xlu0.b32.end [16/16] 0.0, 128
  %v38 = vpop.trf.xlu0
  %v39 = vpop.trf.xlu0
  %v40 = vpop.trf.xlu0
  %v41 = vpop.trf.xlu0
  %v42 = vpop.trf.xlu0
  %v43 = vpop.trf.xlu0
  %v44 = vpop.trf.xlu0
  %v45 = vpop.trf.xlu0
  %v46 = vpop.trf.xlu0
  %v47 = vpop.trf.xlu0
  %v48 = vpop.trf.xlu0
  %v49 = vpop.trf.xlu0
  %v50 = vpop.trf.xlu0
  %v51 = vpop.trf.xlu0
  %v52 = vpop.trf.xlu0
  %v53 = vpop.trf.xlu0
  %vm54 = vcmask 31744
  %v56 = vsel %vm54, %v38, 0
  %v59 = vsel %vm54, %v39, 0
  %vm61 = vcmask 1043456
  %v63 = vsel %vm61, %v20, 0
  %65 = vmatpush.msra.mxu0 0.0
  %66 = vmatpush.msra.mxu0 0.0
  %67 = vmatpush.msra.mxu0 0.0
  %68 = vmatpush.msra.mxu0 0.0
  %69 = vmatpush.msra.mxu0 0.0
  %70 = vmatpush.msra.mxu0 0.0
  %71 = vmatpush.msra.mxu0 0.0
  %72 = vmatpush.msra.mxu0 0.0
  %73 = vmatpush.msra.mxu0 0.0
  %74 = vmatpush.msra.mxu0 0.0
  %75 = vmatpush.msra.mxu0 0.0
  %76 = vmatpush.msra.mxu0 0.0
  %77 = vmatpush.msra.mxu0 0.0
  %78 = vmatpush.msra.mxu0 0.0
  %79 = vmatpush.msra.mxu0 0.0
  %80 = vmatpush.msra.mxu0 %v63
  %81 = vmatmul.f32.gmra.mxu0 %v56
  %v82 = vpop.f32.mrf.mxu0
  %v83 = vadd.f32 0.0, %v82
  %84 = vmatmul.f32.gmra.mxu0 %v59
  %v85 = vpop.f32.mrf.mxu0
  %v86 = vadd.f32 0.0, %v85
  %87 = vdwg.mxu0
  %s88 = scalar_lea.vmem %s0, 4
  %v89 = vld [vmem:[%s88] sm:$0xf]
  %90 = vxpose.xlu0.b32.start [1/16] %v89, 128
  %91 = vxpose.xlu0.b32.cont [2/16] 0.0, 128
  %92 = vxpose.xlu0.b32.cont [3/16] 0.0, 128
  %93 = vxpose.xlu0.b32.cont [4/16] 0.0, 128
  %94 = vxpose.xlu0.b32.cont [5/16] 0.0, 128
  %95 = vxpose.xlu0.b32.cont [6/16] 0.0, 128
  %96 = vxpose.xlu0.b32.cont [7/16] 0.0, 128
  %97 = vxpose.xlu0.b32.cont [8/16] 0.0, 128
  %98 = vxpose.xlu0.b32.cont [9/16] 0.0, 128
  %99 = vxpose.xlu0.b32.cont [10/16] 0.0, 128
  %100 = vxpose.xlu0.b32.cont [11/16] 0.0, 128
  %101 = vxpose.xlu0.b32.cont [12/16] 0.0, 128
  %102 = vxpose.xlu0.b32.cont [13/16] 0.0, 128
  %103 = vxpose.xlu0.b32.cont [14/16] 0.0, 128
  %104 = vxpose.xlu0.b32.cont [15/16] 0.0, 128
  %105 = vxpose.xlu0.b32.end [16/16] 0.0, 128
  %v106 = vpop.trf.xlu0
  %v107 = vpop.trf.xlu0
  %v108 = vpop.trf.xlu0
  %v109 = vpop.trf.xlu0
  %v110 = vpop.trf.xlu0
  %v111 = vpop.trf.xlu0
  %v112 = vpop.trf.xlu0
  %v113 = vpop.trf.xlu0
  %v114 = vpop.trf.xlu0
  %v115 = vpop.trf.xlu0
  %v116 = vpop.trf.xlu0
  %v117 = vpop.trf.xlu0
  %v118 = vpop.trf.xlu0
  %v119 = vpop.trf.xlu0
  %v120 = vpop.trf.xlu0
  %v121 = vpop.trf.xlu0
  %v123 = vsel %vm54, %v106, 0
  %v126 = vsel %vm54, %v107, 0
  %128 = vmatpush.msra.mxu0 0.0
  %129 = vmatpush.msra.mxu0 0.0
  %130 = vmatpush.msra.mxu0 0.0
  %131 = vmatpush.msra.mxu0 0.0
  %132 = vmatpush.msra.mxu0 0.0
  %133 = vmatpush.msra.mxu0 0.0
  %134 = vmatpush.msra.mxu0 0.0
  %135 = vmatpush.msra.mxu0 0.0
  %136 = vmatpush.msra.mxu0 0.0
  %137 = vmatpush.msra.mxu0 0.0
  %138 = vmatpush.msra.mxu0 0.0
  %139 = vmatpush.msra.mxu0 0.0
  %140 = vmatpush.msra.mxu0 0.0
  %141 = vmatpush.msra.mxu0 0.0
  %142 = vmatpush.msra.mxu0 0.0
  %143 = vmatpush.msra.mxu0 %v63
  %144 = vmatmul.f32.gmra.mxu0 %v123
  %v145 = vpop.f32.mrf.mxu0
  %v146 = vadd.f32 0.0, %v145
  %147 = vmatmul.f32.gmra.mxu0 %v126
  %v148 = vpop.f32.mrf.mxu0
  %v149 = vadd.f32 0.0, %v148
  %150 = vdwg.mxu0
  %v151 = vld [vmem:[%s1 + $0x8] sm:$0xff]
  %v152 = vld [vmem:[%s1 + $0x10] sm:$0xff]
  %v153 = vld [vmem:[%s1 + $0x18] sm:$0xff]
  %v154 = vld [vmem:[%s1 + $0x20] sm:$0xff]
  %v155 = vadd.f32 %v83, %v151
  %v156 = vadd.f32 %v86, %v152
  %v157 = vadd.f32 %v146, %v153
  %v158 = vadd.f32 %v149, %v154
  %v159 = vld [vmem:[%s2] sm:$0xff]
  %v160 = vld [vmem:[%s2 + $0x8] sm:$0xff]
  %v161 = vld [vmem:[%s2 + $0x10] sm:$0xff]
  %v162 = vld [vmem:[%s2 + $0x18] sm:$0xff]
  %v163 = vld [vmem:[%s2 + $0x20] sm:$0x1]
  %v164 = vperm.slane %v163, 0
  %vm165 = vcmask 261120
  %v167 = vsel %vm165, %v155, 0
  %v170 = vsel %vm165, %v156, 0
  %v173 = vsel %vm165, %v157, 0
  %v176 = vsel %vm165, %v158, 0
  %178 = vmatpush.msra.mxu0 0.0
  %179 = vmatpush.msra.mxu0 0.0
  %180 = vmatpush.msra.mxu0 0.0
  %181 = vmatpush.msra.mxu0 0.0
  %182 = vmatpush.msra.mxu0 0.0
  %183 = vmatpush.msra.mxu0 0.0
  %184 = vmatpush.msra.mxu0 0.0
  %185 = vmatpush.msra.mxu0 0.0
  %186 = vmatpush.msra.mxu0 0.0
  %187 = vmatpush.msra.mxu0 0.0
  %188 = vmatpush.msra.mxu0 0.0
  %189 = vmatpush.msra.mxu0 0.0
  %190 = vmatpush.msra.mxu0 %v162
  %191 = vmatpush.msra.mxu0 %v161
  %192 = vmatpush.msra.mxu0 %v160
  %193 = vmatpush.msra.mxu0 %v159
  %194 = vmatmul.f32.gmra.mxu0 %v167
  %v195 = vpop.f32.mrf.mxu0
  %v196 = vadd.f32 %v164, %v195
  %197 = vmatmul.f32.gmra.mxu0 %v170
  %v198 = vpop.f32.mrf.mxu0
  %v199 = vadd.f32 %v164, %v198
  %200 = vmatmul.f32.gmra.mxu0 %v173
  %v201 = vpop.f32.mrf.mxu0
  %v202 = vadd.f32 %v164, %v201
  %203 = vmatmul.f32.gmra.mxu0 %v176
  %v204 = vpop.f32.mrf.mxu0
  %v205 = vadd.f32 %v164, %v204
  %206 = vdwg.mxu0
  %v207 = vld [vmem:[%s1 + $0x138] sm:$0xff]
  %v208 = vld [vmem:[%s1 + $0x140] sm:$0xff]
  %v209 = vld [vmem:[%s1 + $0x148] sm:$0xff]
  %v210 = vld [vmem:[%s1 + $0x150] sm:$0xff]
  %v211 = vld [vmem:[%s1 + $0x158] sm:$0xff]
  %v212 = vld [vmem:[%s1 + $0x160] sm:$0xff]
  %v213 = vld [vmem:[%s1 + $0x168] sm:$0xff]
  %v214 = vld [vmem:[%s1 + $0x170] sm:$0xff]
  %v215 = vld [vmem:[%s1 + $0x178] sm:$0xff]
  %v216 = vld [vmem:[%s1 + $0x180] sm:$0xff]
  %v217 = vld [vmem:[%s1 + $0x188] sm:$0xff]
  %v218 = vld [vmem:[%s1 + $0x190] sm:$0xff]
  %v219 = vld [vmem:[%s1 + $0x198] sm:$0xff]
  %v220 = vld [vmem:[%s1 + $0x1a0] sm:$0xff]
  %v221 = vld [vmem:[%s1 + $0x1a8] sm:$0xff]
  %v222 = vld [vmem:[%s1 + $0x1b0] sm:$0xff]
  %v223 = vmul.f32 %v196, %v207
  %v224 = vmul.f32 %v199, %v208
  %v225 = vmul.f32 %v202, %v209
  %v226 = vmul.f32 %v205, %v210
  %v227 = vmul.f32 %v196, %v211
  %v228 = vmul.f32 %v199, %v212
  %v229 = vmul.f32 %v202, %v213
  %v230 = vmul.f32 %v205, %v214
  %v231 = vmul.f32 %v196, %v215
  %v232 = vmul.f32 %v199, %v216
  %v233 = vmul.f32 %v202, %v217
  %v234 = vmul.f32 %v205, %v218
  %v235 = vmul.f32 %v196, %v219
  %v236 = vmul.f32 %v199, %v220
  %v237 = vmul.f32 %v202, %v221
  %v238 = vmul.f32 %v205, %v222
  %243 = vrot.lane.b32.xlu0 %v196, 96
  %v244 = vpop.permute.xlu0 %243
  %245 = vrot.lane.b32.xlu0 %v199, 96
  %v246 = vpop.permute.xlu0 %245
  %247 = vrot.lane.b32.xlu0 %v202, 96
  %v248 = vpop.permute.xlu0 %247
  %249 = vrot.lane.b32.xlu0 %v205, 96
  %v250 = vpop.permute.xlu0 %249
  %v252 = vsel %vm165, %v223, 0
  %v255 = vsel %vm165, %v224, 0
  %v258 = vsel %vm165, %v225, 0
  %v261 = vsel %vm165, %v226, 0
  %v264 = vsel %vm165, %v227, 0
  %v267 = vsel %vm165, %v228, 0
  %v270 = vsel %vm165, %v229, 0
  %v273 = vsel %vm165, %v230, 0
  %v276 = vsel %vm165, %v231, 0
  %v279 = vsel %vm165, %v232, 0
  %v282 = vsel %vm165, %v233, 0
  %v285 = vsel %vm165, %v234, 0
  %v288 = vsel %vm165, %v235, 0
  %v291 = vsel %vm165, %v236, 0
  %v294 = vsel %vm165, %v237, 0
  %v297 = vsel %vm165, %v238, 0
  %v299 = vsel %vm165, %v244, 0
  %v301 = vsel %vm165, %v246, 0
  %v303 = vsel %vm165, %v248, 0
  %v305 = vsel %vm165, %v250, 0
  %307 = vmatpush.xpose.msra.mxu0 0.0
  %308 = vmatpush.xpose.msra.mxu0 0.0
  %309 = vmatpush.xpose.msra.mxu0 0.0
  %310 = vmatpush.xpose.msra.mxu0 0.0
  %311 = vmatpush.xpose.msra.mxu0 0.0
  %312 = vmatpush.xpose.msra.mxu0 0.0
  %313 = vmatpush.xpose.msra.mxu0 0.0
  %314 = vmatpush.xpose.msra.mxu0 0.0
  %315 = vmatpush.xpose.msra.mxu0 0.0
  %316 = vmatpush.xpose.msra.mxu0 0.0
  %317 = vmatpush.xpose.msra.mxu0 0.0
  %318 = vmatpush.xpose.msra.mxu0 0.0
  %319 = vmatpush.xpose.msra.mxu0 %v305
  %320 = vmatpush.xpose.msra.mxu0 %v303
  %321 = vmatpush.xpose.msra.mxu0 %v301
  %322 = vmatpush.xpose.msra.mxu0 %v299
  %323 = vmatmul.f32.gmra.mxu0 %v252
  %v324 = vpop.f32.mrf.mxu0
  %v325 = vadd.f32 0.0, %v324
  %326 = vmatmul.f32.gmra.mxu0 %v255
  %v327 = vpop.f32.mrf.mxu0
  %v328 = vadd.f32 0.0, %v327
  %329 = vmatmul.f32.gmra.mxu0 %v258
  %v330 = vpop.f32.mrf.mxu0
  %v331 = vadd.f32 0.0, %v330
  %332 = vmatmul.f32.gmra.mxu0 %v261
  %v333 = vpop.f32.mrf.mxu0
  %v334 = vadd.f32 0.0, %v333
  %335 = vmatmul.f32.gmra.mxu0 %v264
  %v336 = vpop.f32.mrf.mxu0
  %v337 = vadd.f32 0.0, %v336
  %338 = vmatmul.f32.gmra.mxu0 %v267
  %v339 = vpop.f32.mrf.mxu0
  %v340 = vadd.f32 0.0, %v339
  %341 = vmatmul.f32.gmra.mxu0 %v270
  %v342 = vpop.f32.mrf.mxu0
  %v343 = vadd.f32 0.0, %v342
  %344 = vmatmul.f32.gmra.mxu0 %v273
  %v345 = vpop.f32.mrf.mxu0
  %v346 = vadd.f32 0.0, %v345
  %347 = vmatmul.f32.gmra.mxu0 %v276
  %v348 = vpop.f32.mrf.mxu0
  %v349 = vadd.f32 0.0, %v348
  %350 = vmatmul.f32.gmra.mxu0 %v279
  %v351 = vpop.f32.mrf.mxu0
  %v352 = vadd.f32 0.0, %v351
  %353 = vmatmul.f32.gmra.mxu0 %v282
  %v354 = vpop.f32.mrf.mxu0
  %v355 = vadd.f32 0.0, %v354
  %356 = vmatmul.f32.gmra.mxu0 %v285
  %v357 = vpop.f32.mrf.mxu0
  %v358 = vadd.f32 0.0, %v357
  %359 = vmatmul.f32.gmra.mxu0 %v288
  %v360 = vpop.f32.mrf.mxu0
  %v361 = vadd.f32 0.0, %v360
  %362 = vmatmul.f32.gmra.mxu0 %v291
  %v363 = vpop.f32.mrf.mxu0
  %v364 = vadd.f32 0.0, %v363
  %365 = vmatmul.f32.gmra.mxu0 %v294
  %v366 = vpop.f32.mrf.mxu0
  %v367 = vadd.f32 0.0, %v366
  %368 = vmatmul.f32.gmra.mxu0 %v297
  %v369 = vpop.f32.mrf.mxu0
  %v370 = vadd.f32 0.0, %v369
  %371 = vdwg.mxu0
  %v372 = vmul.f32 %v325, 0.35355338
  %v373 = vmul.f32 %v328, 0.35355338
  %v374 = vmul.f32 %v331, 0.35355338
  %v375 = vmul.f32 %v334, 0.35355338
  %v376 = vmul.f32 %v337, 0.35355338
  %v377 = vmul.f32 %v340, 0.35355338
  %v378 = vmul.f32 %v343, 0.35355338
  %v379 = vmul.f32 %v346, 0.35355338
  %v380 = vmul.f32 %v349, 0.35355338
  %v381 = vmul.f32 %v352, 0.35355338
  %v382 = vmul.f32 %v355, 0.35355338
  %v383 = vmul.f32 %v358, 0.35355338
  %v384 = vmul.f32 %v361, 0.35355338
  %v385 = vmul.f32 %v364, 0.35355338
  %v386 = vmul.f32 %v367, 0.35355338
  %v387 = vmul.f32 %v370, 0.35355338
  %v388 = vld [vmem:[%s1 + $0xb8] sm:$0xff]
  %v389 = vld [vmem:[%s1 + $0xc0] sm:$0xff]
  %v390 = vld [vmem:[%s1 + $0xc8] sm:$0xff]
  %v391 = vld [vmem:[%s1 + $0xd0] sm:$0xff]
  %v392 = vld [vmem:[%s1 + $0xd8] sm:$0xff]
  %v393 = vld [vmem:[%s1 + $0xe0] sm:$0xff]
  %v394 = vld [vmem:[%s1 + $0xe8] sm:$0xff]
  %v395 = vld [vmem:[%s1 + $0xf0] sm:$0xff]
  %v396 = vld [vmem:[%s1 + $0xf8] sm:$0xff]
  %v397 = vld [vmem:[%s1 + $0x100] sm:$0xff]
  %v398 = vld [vmem:[%s1 + $0x108] sm:$0xff]
  %v399 = vld [vmem:[%s1 + $0x110] sm:$0xff]
  %v400 = vld [vmem:[%s1 + $0x118] sm:$0xff]
  %v401 = vld [vmem:[%s1 + $0x120] sm:$0xff]
  %v402 = vld [vmem:[%s1 + $0x128] sm:$0xff]
  %v403 = vld [vmem:[%s1 + $0x130] sm:$0xff]
  %v404 = vadd.f32 %v372, %v388
  %v405 = vadd.f32 %v373, %v389
  %v406 = vadd.f32 %v374, %v390
  %v407 = vadd.f32 %v375, %v391
  %v408 = vadd.f32 %v376, %v392
  %v409 = vadd.f32 %v377, %v393
  %v410 = vadd.f32 %v378, %v394
  %v411 = vadd.f32 %v379, %v395
  %v412 = vadd.f32 %v380, %v396
  %v413 = vadd.f32 %v381, %v397
  %v414 = vadd.f32 %v382, %v398
  %v415 = vadd.f32 %v383, %v399
  %v416 = vadd.f32 %v384, %v400
  %v417 = vadd.f32 %v385, %v401
  %v418 = vadd.f32 %v386, %v402
  %v419 = vadd.f32 %v387, %v403
  %v420 = vsel %vm165, %v404, -inf
  %421 = vmax.xlane.f32.xlu0 %v420
  %v422 = vpop.xlane.xlu0 %421
  %v423 = vsel %vm165, %v405, -inf
  %424 = vmax.xlane.f32.xlu0 %v423
  %v425 = vpop.xlane.xlu0 %424
  %v426 = vsel %vm165, %v406, -inf
  %427 = vmax.xlane.f32.xlu0 %v426
  %v428 = vpop.xlane.xlu0 %427
  %v429 = vsel %vm165, %v407, -inf
  %430 = vmax.xlane.f32.xlu0 %v429
  %v431 = vpop.xlane.xlu0 %430
  %v432 = vsel %vm165, %v408, -inf
  %433 = vmax.xlane.f32.xlu0 %v432
  %v434 = vpop.xlane.xlu0 %433
  %v435 = vsel %vm165, %v409, -inf
  %436 = vmax.xlane.f32.xlu0 %v435
  %v437 = vpop.xlane.xlu0 %436
  %v438 = vsel %vm165, %v410, -inf
  %439 = vmax.xlane.f32.xlu0 %v438
  %v440 = vpop.xlane.xlu0 %439
  %v441 = vsel %vm165, %v411, -inf
  %442 = vmax.xlane.f32.xlu0 %v441
  %v443 = vpop.xlane.xlu0 %442
  %v444 = vsel %vm165, %v412, -inf
  %445 = vmax.xlane.f32.xlu0 %v444
  %v446 = vpop.xlane.xlu0 %445
  %v447 = vsel %vm165, %v413, -inf
  %448 = vmax.xlane.f32.xlu0 %v447
  %v449 = vpop.xlane.xlu0 %448
  %v450 = vsel %vm165, %v414, -inf
  %451 = vmax.xlane.f32.xlu0 %v450
  %v452 = vpop.xlane.xlu0 %451
  %v453 = vsel %vm165, %v415, -inf
  %454 = vmax.xlane.f32.xlu0 %v453
  %v455 = vpop.xlane.xlu0 %454
  %v456 = vsel %vm165, %v416, -inf
  %457 = vmax.xlane.f32.xlu0 %v456
  %v458 = vpop.xlane.xlu0 %457
  %v459 = vsel %vm165, %v417, -inf
  %460 = vmax.xlane.f32.xlu0 %v459
  %v461 = vpop.xlane.xlu0 %460
  %v462 = vsel %vm165, %v418, -inf
  %463 = vmax.xlane.f32.xlu0 %v462
  %v464 = vpop.xlane.xlu0 %463
  %v465 = vsel %vm165, %v419, -inf
  %466 = vmax.xlane.f32.xlu0 %v465
  %v467 = vpop.xlane.xlu0 %466
  %v468 = vsub.f32 %v404, %v422
  %v469 = vsub.f32 %v405, %v425
  %v470 = vsub.f32 %v406, %v428
  %v471 = vsub.f32 %v407, %v431
  %v472 = vsub.f32 %v408, %v434
  %v473 = vsub.f32 %v409, %v437
  %v474 = vsub.f32 %v410, %v440
  %v475 = vsub.f32 %v411, %v443
  %v476 = vsub.f32 %v412, %v446
  %v477 = vsub.f32 %v413, %v449
  %v478 = vsub.f32 %v414, %v452
  %v479 = vsub.f32 %v415, %v455
  %v480 = vsub.f32 %v416, %v458
  %v481 = vsub.f32 %v417, %v461
  %v482 = vsub.f32 %v418, %v464
  %v483 = vsub.f32 %v419, %v467
  %v484 = vmul.f32 %v468, 1.442695
  %v485 = vpow.pop %v484
  %v486 = vmul.f32 %v469, 1.442695
  %v487 = vpow.pop %v486
  %v488 = vmul.f32 %v470, 1.442695
  %v489 = vpow.pop %v488
  %v490 = vmul.f32 %v471, 1.442695
  %v491 = vpow.pop %v490
  %v492 = vmul.f32 %v472, 1.442695
  %v493 = vpow.pop %v492
  %v494 = vmul.f32 %v473, 1.442695
  %v495 = vpow.pop %v494
  %v496 = vmul.f32 %v474, 1.442695
  %v497 = vpow.pop %v496
  %v498 = vmul.f32 %v475, 1.442695
  %v499 = vpow.pop %v498
  %v500 = vmul.f32 %v476, 1.442695
  %v501 = vpow.pop %v500
  %v502 = vmul.f32 %v477, 1.442695
  %v503 = vpow.pop %v502
  %v504 = vmul.f32 %v478, 1.442695
  %v505 = vpow.pop %v504
  %v506 = vmul.f32 %v479, 1.442695
  %v507 = vpow.pop %v506
  %v508 = vmul.f32 %v480, 1.442695
  %v509 = vpow.pop %v508
  %v510 = vmul.f32 %v481, 1.442695
  %v511 = vpow.pop %v510
  %v512 = vmul.f32 %v482, 1.442695
  %v513 = vpow.pop %v512
  %v514 = vmul.f32 %v483, 1.442695
  %v515 = vpow.pop %v514
  %v516 = vsel %vm165, %v485, 0.0
  %517 = vadd.xlane.f32.xlu0 %v516
  %v518 = vpop.xlane.xlu0 %517
  %v519 = vsel %vm165, %v487, 0.0
  %520 = vadd.xlane.f32.xlu0 %v519
  %v521 = vpop.xlane.xlu0 %520
  %v522 = vsel %vm165, %v489, 0.0
  %523 = vadd.xlane.f32.xlu0 %v522
  %v524 = vpop.xlane.xlu0 %523
  %v525 = vsel %vm165, %v491, 0.0
  %526 = vadd.xlane.f32.xlu0 %v525
  %v527 = vpop.xlane.xlu0 %526
  %v528 = vsel %vm165, %v493, 0.0
  %529 = vadd.xlane.f32.xlu0 %v528
  %v530 = vpop.xlane.xlu0 %529
  %v531 = vsel %vm165, %v495, 0.0
  %532 = vadd.xlane.f32.xlu0 %v531
  %v533 = vpop.xlane.xlu0 %532
  %v534 = vsel %vm165, %v497, 0.0
  %535 = vadd.xlane.f32.xlu0 %v534
  %v536 = vpop.xlane.xlu0 %535
  %v537 = vsel %vm165, %v499, 0.0
  %538 = vadd.xlane.f32.xlu0 %v537
  %v539 = vpop.xlane.xlu0 %538
  %v540 = vsel %vm165, %v501, 0.0
  %541 = vadd.xlane.f32.xlu0 %v540
  %v542 = vpop.xlane.xlu0 %541
  %v543 = vsel %vm165, %v503, 0.0
  %544 = vadd.xlane.f32.xlu0 %v543
  %v545 = vpop.xlane.xlu0 %544
  %v546 = vsel %vm165, %v505, 0.0
  %547 = vadd.xlane.f32.xlu0 %v546
  %v548 = vpop.xlane.xlu0 %547
  %v549 = vsel %vm165, %v507, 0.0
  %550 = vadd.xlane.f32.xlu0 %v549
  %v551 = vpop.xlane.xlu0 %550
  %v552 = vsel %vm165, %v509, 0.0
  %553 = vadd.xlane.f32.xlu0 %v552
  %v554 = vpop.xlane.xlu0 %553
  %v555 = vsel %vm165, %v511, 0.0
  %556 = vadd.xlane.f32.xlu0 %v555
  %v557 = vpop.xlane.xlu0 %556
  %v558 = vsel %vm165, %v513, 0.0
  %559 = vadd.xlane.f32.xlu0 %v558
  %v560 = vpop.xlane.xlu0 %559
  %v561 = vsel %vm165, %v515, 0.0
  %562 = vadd.xlane.f32.xlu0 %v561
  %v563 = vpop.xlane.xlu0 %562
  %v564 = vrcp.pop %v518
  %v565 = vmul.f32 %v518, %v564
  %v566 = vsub.f32 1.0, %v565
  %v567 = vmul.f32 %v564, %v566
  %v568 = vadd.f32 %v564, %v567
  %vm569 = vweird.f32 %v518
  %vm570 = vweird.f32 %v564
  %vm571 = vmor %vm569, %vm570
  %v572 = vsel %vm571, %v564, %v568
  %v573 = vand.u32 2147483647, %v518
  %vm574 = vcmp.eq.f32.partialorder %v573, 8.507059e+37
  %v575 = vand.u32 %v518, 2147483648
  %v576 = vor.u32 1.1754944e-38, %v575
  %v577 = vsel %vm574, %v576, %v572
  %v578 = vrcp.pop %v521
  %v579 = vmul.f32 %v521, %v578
  %v580 = vsub.f32 1.0, %v579
  %v581 = vmul.f32 %v578, %v580
  %v582 = vadd.f32 %v578, %v581
  %vm583 = vweird.f32 %v521
  %vm584 = vweird.f32 %v578
  %vm585 = vmor %vm583, %vm584
  %v586 = vsel %vm585, %v578, %v582
  %v587 = vand.u32 2147483647, %v521
  %vm588 = vcmp.eq.f32.partialorder %v587, 8.507059e+37
  %v589 = vand.u32 %v521, 2147483648
  %v590 = vor.u32 1.1754944e-38, %v589
  %v591 = vsel %vm588, %v590, %v586
  %v592 = vrcp.pop %v524
  %v593 = vmul.f32 %v524, %v592
  %v594 = vsub.f32 1.0, %v593
  %v595 = vmul.f32 %v592, %v594
  %v596 = vadd.f32 %v592, %v595
  %vm597 = vweird.f32 %v524
  %vm598 = vweird.f32 %v592
  %vm599 = vmor %vm597, %vm598
  %v600 = vsel %vm599, %v592, %v596
  %v601 = vand.u32 2147483647, %v524
  %vm602 = vcmp.eq.f32.partialorder %v601, 8.507059e+37
  %v603 = vand.u32 %v524, 2147483648
  %v604 = vor.u32 1.1754944e-38, %v603
  %v605 = vsel %vm602, %v604, %v600
  %v606 = vrcp.pop %v527
  %v607 = vmul.f32 %v527, %v606
  %v608 = vsub.f32 1.0, %v607
  %v609 = vmul.f32 %v606, %v608
  %v610 = vadd.f32 %v606, %v609
  %vm611 = vweird.f32 %v527
  %vm612 = vweird.f32 %v606
  %vm613 = vmor %vm611, %vm612
  %v614 = vsel %vm613, %v606, %v610
  %v615 = vand.u32 2147483647, %v527
  %vm616 = vcmp.eq.f32.partialorder %v615, 8.507059e+37
  %v617 = vand.u32 %v527, 2147483648
  %v618 = vor.u32 1.1754944e-38, %v617
  %v619 = vsel %vm616, %v618, %v614
  %v620 = vrcp.pop %v530
  %v621 = vmul.f32 %v530, %v620
  %v622 = vsub.f32 1.0, %v621
  %v623 = vmul.f32 %v620, %v622
  %v624 = vadd.f32 %v620, %v623
  %vm625 = vweird.f32 %v530
  %vm626 = vweird.f32 %v620
  %vm627 = vmor %vm625, %vm626
  %v628 = vsel %vm627, %v620, %v624
  %v629 = vand.u32 2147483647, %v530
  %vm630 = vcmp.eq.f32.partialorder %v629, 8.507059e+37
  %v631 = vand.u32 %v530, 2147483648
  %v632 = vor.u32 1.1754944e-38, %v631
  %v633 = vsel %vm630, %v632, %v628
  %v634 = vrcp.pop %v533
  %v635 = vmul.f32 %v533, %v634
  %v636 = vsub.f32 1.0, %v635
  %v637 = vmul.f32 %v634, %v636
  %v638 = vadd.f32 %v634, %v637
  %vm639 = vweird.f32 %v533
  %vm640 = vweird.f32 %v634
  %vm641 = vmor %vm639, %vm640
  %v642 = vsel %vm641, %v634, %v638
  %v643 = vand.u32 2147483647, %v533
  %vm644 = vcmp.eq.f32.partialorder %v643, 8.507059e+37
  %v645 = vand.u32 %v533, 2147483648
  %v646 = vor.u32 1.1754944e-38, %v645
  %v647 = vsel %vm644, %v646, %v642
  %v648 = vrcp.pop %v536
  %v649 = vmul.f32 %v536, %v648
  %v650 = vsub.f32 1.0, %v649
  %v651 = vmul.f32 %v648, %v650
  %v652 = vadd.f32 %v648, %v651
  %vm653 = vweird.f32 %v536
  %vm654 = vweird.f32 %v648
  %vm655 = vmor %vm653, %vm654
  %v656 = vsel %vm655, %v648, %v652
  %v657 = vand.u32 2147483647, %v536
  %vm658 = vcmp.eq.f32.partialorder %v657, 8.507059e+37
  %v659 = vand.u32 %v536, 2147483648
  %v660 = vor.u32 1.1754944e-38, %v659
  %v661 = vsel %vm658, %v660, %v656
  %v662 = vrcp.pop %v539
  %v663 = vmul.f32 %v539, %v662
  %v664 = vsub.f32 1.0, %v663
  %v665 = vmul.f32 %v662, %v664
  %v666 = vadd.f32 %v662, %v665
  %vm667 = vweird.f32 %v539
  %vm668 = vweird.f32 %v662
  %vm669 = vmor %vm667, %vm668
  %v670 = vsel %vm669, %v662, %v666
  %v671 = vand.u32 2147483647, %v539
  %vm672 = vcmp.eq.f32.partialorder %v671, 8.507059e+37
  %v673 = vand.u32 %v539, 2147483648
  %v674 = vor.u32 1.1754944e-38, %v673
  %v675 = vsel %vm672, %v674, %v670
  %v676 = vrcp.pop %v542
  %v677 = vmul.f32 %v542, %v676
  %v678 = vsub.f32 1.0, %v677
  %v679 = vmul.f32 %v676, %v678
  %v680 = vadd.f32 %v676, %v679
  %vm681 = vweird.f32 %v542
  %vm682 = vweird.f32 %v676
  %vm683 = vmor %vm681, %vm682
  %v684 = vsel %vm683, %v676, %v680
  %v685 = vand.u32 2147483647, %v542
  %vm686 = vcmp.eq.f32.partialorder %v685, 8.507059e+37
  %v687 = vand.u32 %v542, 2147483648
  %v688 = vor.u32 1.1754944e-38, %v687
  %v689 = vsel %vm686, %v688, %v684
  %v690 = vrcp.pop %v545
  %v691 = vmul.f32 %v545, %v690
  %v692 = vsub.f32 1.0, %v691
  %v693 = vmul.f32 %v690, %v692
  %v694 = vadd.f32 %v690, %v693
  %vm695 = vweird.f32 %v545
  %vm696 = vweird.f32 %v690
  %vm697 = vmor %vm695, %vm696
  %v698 = vsel %vm697, %v690, %v694
  %v699 = vand.u32 2147483647, %v545
  %vm700 = vcmp.eq.f32.partialorder %v699, 8.507059e+37
  %v701 = vand.u32 %v545, 2147483648
  %v702 = vor.u32 1.1754944e-38, %v701
  %v703 = vsel %vm700, %v702, %v698
  %v704 = vrcp.pop %v548
  %v705 = vmul.f32 %v548, %v704
  %v706 = vsub.f32 1.0, %v705
  %v707 = vmul.f32 %v704, %v706
  %v708 = vadd.f32 %v704, %v707
  %vm709 = vweird.f32 %v548
  %vm710 = vweird.f32 %v704
  %vm711 = vmor %vm709, %vm710
  %v712 = vsel %vm711, %v704, %v708
  %v713 = vand.u32 2147483647, %v548
  %vm714 = vcmp.eq.f32.partialorder %v713, 8.507059e+37
  %v715 = vand.u32 %v548, 2147483648
  %v716 = vor.u32 1.1754944e-38, %v715
  %v717 = vsel %vm714, %v716, %v712
  %v718 = vrcp.pop %v551
  %v719 = vmul.f32 %v551, %v718
  %v720 = vsub.f32 1.0, %v719
  %v721 = vmul.f32 %v718, %v720
  %v722 = vadd.f32 %v718, %v721
  %vm723 = vweird.f32 %v551
  %vm724 = vweird.f32 %v718
  %vm725 = vmor %vm723, %vm724
  %v726 = vsel %vm725, %v718, %v722
  %v727 = vand.u32 2147483647, %v551
  %vm728 = vcmp.eq.f32.partialorder %v727, 8.507059e+37
  %v729 = vand.u32 %v551, 2147483648
  %v730 = vor.u32 1.1754944e-38, %v729
  %v731 = vsel %vm728, %v730, %v726
  %v732 = vrcp.pop %v554
  %v733 = vmul.f32 %v554, %v732
  %v734 = vsub.f32 1.0, %v733
  %v735 = vmul.f32 %v732, %v734
  %v736 = vadd.f32 %v732, %v735
  %vm737 = vweird.f32 %v554
  %vm738 = vweird.f32 %v732
  %vm739 = vmor %vm737, %vm738
  %v740 = vsel %vm739, %v732, %v736
  %v741 = vand.u32 2147483647, %v554
  %vm742 = vcmp.eq.f32.partialorder %v741, 8.507059e+37
  %v743 = vand.u32 %v554, 2147483648
  %v744 = vor.u32 1.1754944e-38, %v743
  %v745 = vsel %vm742, %v744, %v740
  %v746 = vrcp.pop %v557
  %v747 = vmul.f32 %v557, %v746
  %v748 = vsub.f32 1.0, %v747
  %v749 = vmul.f32 %v746, %v748
  %v750 = vadd.f32 %v746, %v749
  %vm751 = vweird.f32 %v557
  %vm752 = vweird.f32 %v746
  %vm753 = vmor %vm751, %vm752
  %v754 = vsel %vm753, %v746, %v750
  %v755 = vand.u32 2147483647, %v557
  %vm756 = vcmp.eq.f32.partialorder %v755, 8.507059e+37
  %v757 = vand.u32 %v557, 2147483648
  %v758 = vor.u32 1.1754944e-38, %v757
  %v759 = vsel %vm756, %v758, %v754
  %v760 = vrcp.pop %v560
  %v761 = vmul.f32 %v560, %v760
  %v762 = vsub.f32 1.0, %v761
  %v763 = vmul.f32 %v760, %v762
  %v764 = vadd.f32 %v760, %v763
  %vm765 = vweird.f32 %v560
  %vm766 = vweird.f32 %v760
  %vm767 = vmor %vm765, %vm766
  %v768 = vsel %vm767, %v760, %v764
  %v769 = vand.u32 2147483647, %v560
  %vm770 = vcmp.eq.f32.partialorder %v769, 8.507059e+37
  %v771 = vand.u32 %v560, 2147483648
  %v772 = vor.u32 1.1754944e-38, %v771
  %v773 = vsel %vm770, %v772, %v768
  %v774 = vrcp.pop %v563
  %v775 = vmul.f32 %v563, %v774
  %v776 = vsub.f32 1.0, %v775
  %v777 = vmul.f32 %v774, %v776
  %v778 = vadd.f32 %v774, %v777
  %vm779 = vweird.f32 %v563
  %vm780 = vweird.f32 %v774
  %vm781 = vmor %vm779, %vm780
  %v782 = vsel %vm781, %v774, %v778
  %v783 = vand.u32 2147483647, %v563
  %vm784 = vcmp.eq.f32.partialorder %v783, 8.507059e+37
  %v785 = vand.u32 %v563, 2147483648
  %v786 = vor.u32 1.1754944e-38, %v785
  %v787 = vsel %vm784, %v786, %v782
  %v788 = vmul.f32 %v485, %v577
  %v789 = vmul.f32 %v487, %v591
  %v790 = vmul.f32 %v489, %v605
  %v791 = vmul.f32 %v491, %v619
  %v792 = vmul.f32 %v493, %v633
  %v793 = vmul.f32 %v495, %v647
  %v794 = vmul.f32 %v497, %v661
  %v795 = vmul.f32 %v499, %v675
  %v796 = vmul.f32 %v501, %v689
  %v797 = vmul.f32 %v503, %v703
  %v798 = vmul.f32 %v505, %v717
  %v799 = vmul.f32 %v507, %v731
  %v800 = vmul.f32 %v509, %v745
  %v801 = vmul.f32 %v511, %v759
  %v802 = vmul.f32 %v513, %v773
  %v803 = vmul.f32 %v515, %v787
  %804 = vrot.lane.b32.xlu0 %v196, 64
  %v805 = vpop.permute.xlu0 %804
  %806 = vrot.lane.b32.xlu0 %v199, 64
  %v807 = vpop.permute.xlu0 %806
  %808 = vrot.lane.b32.xlu0 %v202, 64
  %v809 = vpop.permute.xlu0 %808
  %810 = vrot.lane.b32.xlu0 %v205, 64
  %v811 = vpop.permute.xlu0 %810
  %v817 = vsel %vm165, %v788, 0
  %v820 = vsel %vm165, %v789, 0
  %v823 = vsel %vm165, %v790, 0
  %v826 = vsel %vm165, %v791, 0
  %v829 = vsel %vm165, %v792, 0
  %v832 = vsel %vm165, %v793, 0
  %v835 = vsel %vm165, %v794, 0
  %v838 = vsel %vm165, %v795, 0
  %v841 = vsel %vm165, %v796, 0
  %v844 = vsel %vm165, %v797, 0
  %v847 = vsel %vm165, %v798, 0
  %v850 = vsel %vm165, %v799, 0
  %v853 = vsel %vm165, %v800, 0
  %v856 = vsel %vm165, %v801, 0
  %v859 = vsel %vm165, %v802, 0
  %v862 = vsel %vm165, %v803, 0
  %864 = vmatpush.msra.mxu0 0.0
  %865 = vmatpush.msra.mxu0 0.0
  %866 = vmatpush.msra.mxu0 0.0
  %867 = vmatpush.msra.mxu0 0.0
  %868 = vmatpush.msra.mxu0 0.0
  %869 = vmatpush.msra.mxu0 0.0
  %870 = vmatpush.msra.mxu0 0.0
  %871 = vmatpush.msra.mxu0 0.0
  %872 = vmatpush.msra.mxu0 0.0
  %873 = vmatpush.msra.mxu0 0.0
  %874 = vmatpush.msra.mxu0 0.0
  %875 = vmatpush.msra.mxu0 0.0
  %876 = vmatpush.msra.mxu0 %v811
  %877 = vmatpush.msra.mxu0 %v809
  %878 = vmatpush.msra.mxu0 %v807
  %879 = vmatpush.msra.mxu0 %v805
  %880 = vmatmul.f32.gmra.mxu0 %v817
  %v881 = vpop.f32.mrf.mxu0
  %v882 = vadd.f32 0.0, %v881
  %883 = vmatmul.f32.gmra.mxu0 %v820
  %v884 = vpop.f32.mrf.mxu0
  %v885 = vadd.f32 0.0, %v884
  %886 = vmatmul.f32.gmra.mxu0 %v823
  %v887 = vpop.f32.mrf.mxu0
  %v888 = vadd.f32 0.0, %v887
  %889 = vmatmul.f32.gmra.mxu0 %v826
  %v890 = vpop.f32.mrf.mxu0
  %v891 = vadd.f32 0.0, %v890
  %892 = vmatmul.f32.gmra.mxu0 %v829
  %v893 = vpop.f32.mrf.mxu0
  %v894 = vadd.f32 0.0, %v893
  %895 = vmatmul.f32.gmra.mxu0 %v832
  %v896 = vpop.f32.mrf.mxu0
  %v897 = vadd.f32 0.0, %v896
  %898 = vmatmul.f32.gmra.mxu0 %v835
  %v899 = vpop.f32.mrf.mxu0
  %v900 = vadd.f32 0.0, %v899
  %901 = vmatmul.f32.gmra.mxu0 %v838
  %v902 = vpop.f32.mrf.mxu0
  %v903 = vadd.f32 0.0, %v902
  %904 = vmatmul.f32.gmra.mxu0 %v841
  %v905 = vpop.f32.mrf.mxu0
  %v906 = vadd.f32 0.0, %v905
  %907 = vmatmul.f32.gmra.mxu0 %v844
  %v908 = vpop.f32.mrf.mxu0
  %v909 = vadd.f32 0.0, %v908
  %910 = vmatmul.f32.gmra.mxu0 %v847
  %v911 = vpop.f32.mrf.mxu0
  %v912 = vadd.f32 0.0, %v911
  %913 = vmatmul.f32.gmra.mxu0 %v850
  %v914 = vpop.f32.mrf.mxu0
  %v915 = vadd.f32 0.0, %v914
  %916 = vmatmul.f32.gmra.mxu0 %v853
  %v917 = vpop.f32.mrf.mxu0
  %v918 = vadd.f32 0.0, %v917
  %919 = vmatmul.f32.gmra.mxu0 %v856
  %v920 = vpop.f32.mrf.mxu0
  %v921 = vadd.f32 0.0, %v920
  %922 = vmatmul.f32.gmra.mxu0 %v859
  %v923 = vpop.f32.mrf.mxu0
  %v924 = vadd.f32 0.0, %v923
  %925 = vmatmul.f32.gmra.mxu0 %v862
  %v926 = vpop.f32.mrf.mxu0
  %v927 = vadd.f32 0.0, %v926
  %928 = vdwg.mxu0
  %v929 = vmul.f32 %v882, %v207
  %v930 = vmul.f32 %v885, %v208
  %v931 = vmul.f32 %v888, %v209
  %v932 = vmul.f32 %v891, %v210
  %v933 = vmul.f32 %v894, %v211
  %v934 = vmul.f32 %v897, %v212
  %v935 = vmul.f32 %v900, %v213
  %v936 = vmul.f32 %v903, %v214
  %v937 = vmul.f32 %v906, %v215
  %v938 = vmul.f32 %v909, %v216
  %v939 = vmul.f32 %v912, %v217
  %v940 = vmul.f32 %v915, %v218
  %v941 = vmul.f32 %v918, %v219
  %v942 = vmul.f32 %v921, %v220
  %v943 = vmul.f32 %v924, %v221
  %v944 = vmul.f32 %v927, %v222
  %v945 = vadd.f32 %v929, %v933
  %v946 = vadd.f32 %v930, %v934
  %v947 = vadd.f32 %v931, %v935
  %v948 = vadd.f32 %v932, %v936
  %v949 = vadd.f32 %v945, %v937
  %v950 = vadd.f32 %v946, %v938
  %v951 = vadd.f32 %v947, %v939
  %v952 = vadd.f32 %v948, %v940
  %v953 = vadd.f32 %v949, %v941
  %v954 = vadd.f32 %v950, %v942
  %v955 = vadd.f32 %v951, %v943
  %v956 = vadd.f32 %v952, %v944
  %v957 = vld [vmem:[%s1 + $0x28] sm:$0xff]
  %v958 = vld [vmem:[%s1 + $0x30] sm:$0xff]
  %v959 = vld [vmem:[%s1 + $0x38] sm:$0xff]
  %v960 = vld [vmem:[%s1 + $0x40] sm:$0xff]
  %v961 = vld [vmem:[%s1 + $0x48] sm:$0x1]
  %v962 = vperm.slane %v961, 0
  %v964 = vsel %vm165, %v953, 0
  %v967 = vsel %vm165, %v954, 0
  %v970 = vsel %vm165, %v955, 0
  %v973 = vsel %vm165, %v956, 0
  %975 = vmatpush.msra.mxu0 0.0
  %976 = vmatpush.msra.mxu0 0.0
  %977 = vmatpush.msra.mxu0 0.0
  %978 = vmatpush.msra.mxu0 0.0
  %979 = vmatpush.msra.mxu0 0.0
  %980 = vmatpush.msra.mxu0 0.0
  %981 = vmatpush.msra.mxu0 0.0
  %982 = vmatpush.msra.mxu0 0.0
  %983 = vmatpush.msra.mxu0 0.0
  %984 = vmatpush.msra.mxu0 0.0
  %985 = vmatpush.msra.mxu0 0.0
  %986 = vmatpush.msra.mxu0 0.0
  %987 = vmatpush.msra.mxu0 %v960
  %988 = vmatpush.msra.mxu0 %v959
  %989 = vmatpush.msra.mxu0 %v958
  %990 = vmatpush.msra.mxu0 %v957
  %991 = vmatmul.f32.gmra.mxu0 %v964
  %v992 = vpop.f32.mrf.mxu0
  %v993 = vadd.f32 %v962, %v992
  %994 = vmatmul.f32.gmra.mxu0 %v967
  %v995 = vpop.f32.mrf.mxu0
  %v996 = vadd.f32 %v962, %v995
  %997 = vmatmul.f32.gmra.mxu0 %v970
  %v998 = vpop.f32.mrf.mxu0
  %v999 = vadd.f32 %v962, %v998
  %1000 = vmatmul.f32.gmra.mxu0 %v973
  %v1001 = vpop.f32.mrf.mxu0
  %v1002 = vadd.f32 %v962, %v1001
  %1003 = vdwg.mxu0
  %v1004 = vadd.f32 %v155, %v993
  %v1005 = vadd.f32 %v156, %v996
  %v1006 = vadd.f32 %v157, %v999
  %v1007 = vadd.f32 %v158, %v1002
  %v1008 = vld [vmem:[%s1 + $0x50] sm:$0x1]
  %v1009 = vld [vmem:[%s1 + $0x58] sm:$0x1]
  %v1010 = vsel %vm165, %v1004, 0.0
  %1011 = vadd.xlane.f32.xlu0 %v1010
  %v1012 = vpop.xlane.xlu0 %1011
  %v1013 = vsel %vm165, %v1005, 0.0
  %1014 = vadd.xlane.f32.xlu0 %v1013
  %v1015 = vpop.xlane.xlu0 %1014
  %v1016 = vsel %vm165, %v1006, 0.0
  %1017 = vadd.xlane.f32.xlu0 %v1016
  %v1018 = vpop.xlane.xlu0 %1017
  %v1019 = vsel %vm165, %v1007, 0.0
  %1020 = vadd.xlane.f32.xlu0 %v1019
  %v1021 = vpop.xlane.xlu0 %1020
  %v1022 = vrcp.pop 32.0
  %v1023 = vmul.f32 32.0, %v1022
  %v1024 = vsub.f32 1.0, %v1023
  %v1025 = vmul.f32 %v1022, %v1024
  %v1026 = vadd.f32 %v1022, %v1025
  %vm1027 = vweird.f32 %v1022
  %v1028 = vsel %vm1027, %v1022, %v1026
  %v1029 = vmul.f32 %v1012, %v1028
  %v1030 = vmul.f32 %v1015, %v1028
  %v1031 = vmul.f32 %v1018, %v1028
  %v1032 = vmul.f32 %v1021, %v1028
  %v1033 = vsub.f32 %v1004, %v1029
  %v1034 = vsub.f32 %v1005, %v1030
  %v1035 = vsub.f32 %v1006, %v1031
  %v1036 = vsub.f32 %v1007, %v1032
  %v1037 = vmul.f32 %v1033, %v1033
  %v1038 = vmul.f32 %v1034, %v1034
  %v1039 = vmul.f32 %v1035, %v1035
  %v1040 = vmul.f32 %v1036, %v1036
  %v1041 = vsel %vm165, %v1037, 0.0
  %1042 = vadd.xlane.f32.xlu0 %v1041
  %v1043 = vpop.xlane.xlu0 %1042
  %v1044 = vsel %vm165, %v1038, 0.0
  %1045 = vadd.xlane.f32.xlu0 %v1044
  %v1046 = vpop.xlane.xlu0 %1045
  %v1047 = vsel %vm165, %v1039, 0.0
  %1048 = vadd.xlane.f32.xlu0 %v1047
  %v1049 = vpop.xlane.xlu0 %1048
  %v1050 = vsel %vm165, %v1040, 0.0
  %1051 = vadd.xlane.f32.xlu0 %v1050
  %v1052 = vpop.xlane.xlu0 %1051
  %v1053 = vmul.f32 %v1043, %v1028
  %v1054 = vmul.f32 %v1046, %v1028
  %v1055 = vmul.f32 %v1049, %v1028
  %v1056 = vmul.f32 %v1052, %v1028
  %v1057 = vadd.f32 %v1053, 1e-05
  %v1058 = vadd.f32 %v1054, 1e-05
  %v1059 = vadd.f32 %v1055, 1e-05
  %v1060 = vadd.f32 %v1056, 1e-05
  %v1061 = vrsqrt.pop %v1057
  %v1062 = vmul.f32 %v1061, %v1057
  %v1063 = vmul.f32 %v1062, %v1061
  %v1064 = vmul.f32 0.5, %v1063
  %v1065 = vsub.f32 1.5, %v1064
  %v1066 = vmul.f32 %v1061, %v1065
  %vm1067 = vweird.f32 %v1057
  %vm1068 = vweird.f32 %v1061
  %vm1069 = vmor %vm1067, %vm1068
  %v1070 = vsel %vm1069, %v1061, %v1066
  %v1071 = vrsqrt.pop %v1058
  %v1072 = vmul.f32 %v1071, %v1058
  %v1073 = vmul.f32 %v1072, %v1071
  %v1074 = vmul.f32 0.5, %v1073
  %v1075 = vsub.f32 1.5, %v1074
  %v1076 = vmul.f32 %v1071, %v1075
  %vm1077 = vweird.f32 %v1058
  %vm1078 = vweird.f32 %v1071
  %vm1079 = vmor %vm1077, %vm1078
  %v1080 = vsel %vm1079, %v1071, %v1076
  %v1081 = vrsqrt.pop %v1059
  %v1082 = vmul.f32 %v1081, %v1059
  %v1083 = vmul.f32 %v1082, %v1081
  %v1084 = vmul.f32 0.5, %v1083
  %v1085 = vsub.f32 1.5, %v1084
  %v1086 = vmul.f32 %v1081, %v1085
  %vm1087 = vweird.f32 %v1059
  %vm1088 = vweird.f32 %v1081
  %vm1089 = vmor %vm1087, %vm1088
  %v1090 = vsel %vm1089, %v1081, %v1086
  %v1091 = vrsqrt.pop %v1060
  %v1092 = vmul.f32 %v1091, %v1060
  %v1093 = vmul.f32 %v1092, %v1091
  %v1094 = vmul.f32 0.5, %v1093
  %v1095 = vsub.f32 1.5, %v1094
  %v1096 = vmul.f32 %v1091, %v1095
  %vm1097 = vweird.f32 %v1060
  %vm1098 = vweird.f32 %v1091
  %vm1099 = vmor %vm1097, %vm1098
  %v1100 = vsel %vm1099, %v1091, %v1096
  %v1101 = vmul.f32 %v1033, %v1070
  %v1102 = vmul.f32 %v1034, %v1080
  %v1103 = vmul.f32 %v1035, %v1090
  %v1104 = vmul.f32 %v1036, %v1100
  %v1105 = vperm.slane %v1008, 0
  %v1106 = vmul.f32 %v1101, %v1105
  %v1107 = vmul.f32 %v1102, %v1105
  %v1108 = vmul.f32 %v1103, %v1105
  %v1109 = vmul.f32 %v1104, %v1105
  %v1110 = vperm.slane %v1009, 0
  %v1111 = vadd.f32 %v1106, %v1110
  %v1112 = vadd.f32 %v1107, %v1110
  %v1113 = vadd.f32 %v1108, %v1110
  %v1114 = vadd.f32 %v1109, %v1110
  %v1115 = vld [vmem:[%s3] sm:$0xff]
  %v1116 = vld [vmem:[%s3 + $0x8] sm:$0xff]
  %v1117 = vld [vmem:[%s3 + $0x10] sm:$0xff]
  %v1118 = vld [vmem:[%s3 + $0x18] sm:$0xff]
  %v1119 = vld [vmem:[%s3 + $0x20] sm:$0x1]
  %v1120 = vperm.slane %v1119, 0
  %v1122 = vsel %vm165, %v1111, 0
  %v1125 = vsel %vm165, %v1112, 0
  %v1128 = vsel %vm165, %v1113, 0
  %v1131 = vsel %vm165, %v1114, 0
  %1133 = vmatpush.msra.mxu0 0.0
  %1134 = vmatpush.msra.mxu0 0.0
  %1135 = vmatpush.msra.mxu0 0.0
  %1136 = vmatpush.msra.mxu0 0.0
  %1137 = vmatpush.msra.mxu0 0.0
  %1138 = vmatpush.msra.mxu0 0.0
  %1139 = vmatpush.msra.mxu0 0.0
  %1140 = vmatpush.msra.mxu0 0.0
  %1141 = vmatpush.msra.mxu0 0.0
  %1142 = vmatpush.msra.mxu0 0.0
  %1143 = vmatpush.msra.mxu0 0.0
  %1144 = vmatpush.msra.mxu0 0.0
  %1145 = vmatpush.msra.mxu0 %v1118
  %1146 = vmatpush.msra.mxu0 %v1117
  %1147 = vmatpush.msra.mxu0 %v1116
  %1148 = vmatpush.msra.mxu0 %v1115
  %1149 = vmatmul.f32.gmra.mxu0 %v1122
  %v1150 = vpop.f32.mrf.mxu0
  %v1151 = vadd.f32 %v1120, %v1150
  %1152 = vmatmul.f32.gmra.mxu0 %v1125
  %v1153 = vpop.f32.mrf.mxu0
  %v1154 = vadd.f32 %v1120, %v1153
  %1155 = vmatmul.f32.gmra.mxu0 %v1128
  %v1156 = vpop.f32.mrf.mxu0
  %v1157 = vadd.f32 %v1120, %v1156
  %1158 = vmatmul.f32.gmra.mxu0 %v1131
  %v1159 = vpop.f32.mrf.mxu0
  %v1160 = vadd.f32 %v1120, %v1159
  %1161 = vdwg.mxu0
  %v1162 = vmax.f32 %v1151, 0.0
  %v1163 = vmax.f32 %v1154, 0.0
  %v1164 = vmax.f32 %v1157, 0.0
  %v1165 = vmax.f32 %v1160, 0.0
  %v1166 = vld [vmem:[%s1 + $0x60] sm:$0xff]
  %v1167 = vld [vmem:[%s1 + $0x68] sm:$0xff]
  %vm1168 = vcmask 130048
  %v1170 = vsel %vm1168, %v1162, 0
  %v1173 = vsel %vm1168, %v1163, 0
  %v1176 = vsel %vm1168, %v1164, 0
  %v1179 = vsel %vm1168, %v1165, 0
  %1181 = vmatpush.msra.mxu0 0.0
  %1182 = vmatpush.msra.mxu0 0.0
  %1183 = vmatpush.msra.mxu0 0.0
  %1184 = vmatpush.msra.mxu0 0.0
  %1185 = vmatpush.msra.mxu0 0.0
  %1186 = vmatpush.msra.mxu0 0.0
  %1187 = vmatpush.msra.mxu0 0.0
  %1188 = vmatpush.msra.mxu0 0.0
  %1189 = vmatpush.msra.mxu0 0.0
  %1190 = vmatpush.msra.mxu0 0.0
  %1191 = vmatpush.msra.mxu0 0.0
  %1192 = vmatpush.msra.mxu0 0.0
  %1193 = vmatpush.msra.mxu0 0.0
  %1194 = vmatpush.msra.mxu0 0.0
  %1195 = vmatpush.msra.mxu0 %v1167
  %1196 = vmatpush.msra.mxu0 %v1166
  %1197 = vmatmul.f32.gmra.mxu0 %v1170
  %v1198 = vpop.f32.mrf.mxu0
  %v1199 = vadd.f32 0.0, %v1198
  %1200 = vmatmul.f32.gmra.mxu0 %v1173
  %v1201 = vpop.f32.mrf.mxu0
  %v1202 = vadd.f32 0.0, %v1201
  %1203 = vmatmul.f32.gmra.mxu0 %v1176
  %v1204 = vpop.f32.mrf.mxu0
  %v1205 = vadd.f32 0.0, %v1204
  %1206 = vmatmul.f32.gmra.mxu0 %v1179
  %v1207 = vpop.f32.mrf.mxu0
  %v1208 = vadd.f32 0.0, %v1207
  %1209 = vdwg.mxu0
  %v1210 = vadd.f32 %v1111, %v1199
  %v1211 = vadd.f32 %v1112, %v1202
  %v1212 = vadd.f32 %v1113, %v1205
  %v1213 = vadd.f32 %v1114, %v1208
  %v1214 = vld [vmem:[%s1 + $0x70] sm:$0x1]
  %v1215 = vperm.slane %v1214, 0
  %v1216 = vadd.f32 %v1210, %v1215
  %v1217 = vadd.f32 %v1211, %v1215
  %v1218 = vadd.f32 %v1212, %v1215
  %v1219 = vadd.f32 %v1213, %v1215
  %v1220 = vld [vmem:[%s1 + $0x78] sm:$0x1]
  %v1221 = vld [vmem:[%s1 + $0x80] sm:$0x1]
  %v1222 = vsel %vm165, %v1216, 0.0
  %1223 = vadd.xlane.f32.xlu0 %v1222
  %v1224 = vpop.xlane.xlu0 %1223
  %v1225 = vsel %vm165, %v1217, 0.0
  %1226 = vadd.xlane.f32.xlu0 %v1225
  %v1227 = vpop.xlane.xlu0 %1226
  %v1228 = vsel %vm165, %v1218, 0.0
  %1229 = vadd.xlane.f32.xlu0 %v1228
  %v1230 = vpop.xlane.xlu0 %1229
  %v1231 = vsel %vm165, %v1219, 0.0
  %1232 = vadd.xlane.f32.xlu0 %v1231
  %v1233 = vpop.xlane.xlu0 %1232
  %v1234 = vmul.f32 %v1224, %v1028
  %v1235 = vmul.f32 %v1227, %v1028
  %v1236 = vmul.f32 %v1230, %v1028
  %v1237 = vmul.f32 %v1233, %v1028
  %v1238 = vsub.f32 %v1216, %v1234
  %v1239 = vsub.f32 %v1217, %v1235
  %v1240 = vsub.f32 %v1218, %v1236
  %v1241 = vsub.f32 %v1219, %v1237
  %v1242 = vmul.f32 %v1238, %v1238
  %v1243 = vmul.f32 %v1239, %v1239
  %v1244 = vmul.f32 %v1240, %v1240
  %v1245 = vmul.f32 %v1241, %v1241
  %v1246 = vsel %vm165, %v1242, 0.0
  %1247 = vadd.xlane.f32.xlu0 %v1246
  %v1248 = vpop.xlane.xlu0 %1247
  %v1249 = vsel %vm165, %v1243, 0.0
  %1250 = vadd.xlane.f32.xlu0 %v1249
  %v1251 = vpop.xlane.xlu0 %1250
  %v1252 = vsel %vm165, %v1244, 0.0
  %1253 = vadd.xlane.f32.xlu0 %v1252
  %v1254 = vpop.xlane.xlu0 %1253
  %v1255 = vsel %vm165, %v1245, 0.0
  %1256 = vadd.xlane.f32.xlu0 %v1255
  %v1257 = vpop.xlane.xlu0 %1256
  %v1258 = vmul.f32 %v1248, %v1028
  %v1259 = vmul.f32 %v1251, %v1028
  %v1260 = vmul.f32 %v1254, %v1028
  %v1261 = vmul.f32 %v1257, %v1028
  %v1262 = vadd.f32 %v1258, 1e-05
  %v1263 = vadd.f32 %v1259, 1e-05
  %v1264 = vadd.f32 %v1260, 1e-05
  %v1265 = vadd.f32 %v1261, 1e-05
  %v1266 = vrsqrt.pop %v1262
  %v1267 = vmul.f32 %v1266, %v1262
  %v1268 = vmul.f32 %v1267, %v1266
  %v1269 = vmul.f32 0.5, %v1268
  %v1270 = vsub.f32 1.5, %v1269
  %v1271 = vmul.f32 %v1266, %v1270
  %vm1272 = vweird.f32 %v1262
  %vm1273 = vweird.f32 %v1266
  %vm1274 = vmor %vm1272, %vm1273
  %v1275 = vsel %vm1274, %v1266, %v1271
  %v1276 = vrsqrt.pop %v1263
  %v1277 = vmul.f32 %v1276, %v1263
  %v1278 = vmul.f32 %v1277, %v1276
  %v1279 = vmul.f32 0.5, %v1278
  %v1280 = vsub.f32 1.5, %v1279
  %v1281 = vmul.f32 %v1276, %v1280
  %vm1282 = vweird.f32 %v1263
  %vm1283 = vweird.f32 %v1276
  %vm1284 = vmor %vm1282, %vm1283
  %v1285 = vsel %vm1284, %v1276, %v1281
  %v1286 = vrsqrt.pop %v1264
  %v1287 = vmul.f32 %v1286, %v1264
  %v1288 = vmul.f32 %v1287, %v1286
  %v1289 = vmul.f32 0.5, %v1288
  %v1290 = vsub.f32 1.5, %v1289
  %v1291 = vmul.f32 %v1286, %v1290
  %vm1292 = vweird.f32 %v1264
  %vm1293 = vweird.f32 %v1286
  %vm1294 = vmor %vm1292, %vm1293
  %v1295 = vsel %vm1294, %v1286, %v1291
  %v1296 = vrsqrt.pop %v1265
  %v1297 = vmul.f32 %v1296, %v1265
  %v1298 = vmul.f32 %v1297, %v1296
  %v1299 = vmul.f32 0.5, %v1298
  %v1300 = vsub.f32 1.5, %v1299
  %v1301 = vmul.f32 %v1296, %v1300
  %vm1302 = vweird.f32 %v1265
  %vm1303 = vweird.f32 %v1296
  %vm1304 = vmor %vm1302, %vm1303
  %v1305 = vsel %vm1304, %v1296, %v1301
  %v1306 = vmul.f32 %v1238, %v1275
  %v1307 = vmul.f32 %v1239, %v1285
  %v1308 = vmul.f32 %v1240, %v1295
  %v1309 = vmul.f32 %v1241, %v1305
  %v1310 = vperm.slane %v1220, 0
  %v1311 = vmul.f32 %v1306, %v1310
  %v1312 = vmul.f32 %v1307, %v1310
  %v1313 = vmul.f32 %v1308, %v1310
  %v1314 = vmul.f32 %v1309, %v1310
  %v1315 = vperm.slane %v1221, 0
  %v1316 = vadd.f32 %v1311, %v1315
  %v1317 = vadd.f32 %v1312, %v1315
  %v1318 = vadd.f32 %v1313, %v1315
  %v1319 = vadd.f32 %v1314, %v1315
  %v1320 = vld [vmem:[%s1 + $0x88] sm:$0xff]
  %v1321 = vld [vmem:[%s1 + $0x90] sm:$0xff]
  %v1322 = vld [vmem:[%s1 + $0x98] sm:$0xff]
  %v1323 = vld [vmem:[%s1 + $0xa0] sm:$0xff]
  %v1324 = vld [vmem:[%s1 + $0xa8] sm:$0x1]
  %v1325 = vperm.slane %v1324, 0
  %v1327 = vsel %vm165, %v1316, 0
  %v1330 = vsel %vm165, %v1317, 0
  %v1333 = vsel %vm165, %v1318, 0
  %v1336 = vsel %vm165, %v1319, 0
  %1338 = vmatpush.msra.mxu0 0.0
  %1339 = vmatpush.msra.mxu0 0.0
  %1340 = vmatpush.msra.mxu0 0.0
  %1341 = vmatpush.msra.mxu0 0.0
  %1342 = vmatpush.msra.mxu0 0.0
  %1343 = vmatpush.msra.mxu0 0.0
  %1344 = vmatpush.msra.mxu0 0.0
  %1345 = vmatpush.msra.mxu0 0.0
  %1346 = vmatpush.msra.mxu0 0.0
  %1347 = vmatpush.msra.mxu0 0.0
  %1348 = vmatpush.msra.mxu0 0.0
  %1349 = vmatpush.msra.mxu0 0.0
  %1350 = vmatpush.msra.mxu0 %v1323
  %1351 = vmatpush.msra.mxu0 %v1322
  %1352 = vmatpush.msra.mxu0 %v1321
  %1353 = vmatpush.msra.mxu0 %v1320
  %1354 = vmatmul.f32.gmra.mxu0 %v1327
  %v1355 = vpop.f32.mrf.mxu0
  %v1356 = vadd.f32 %v1325, %v1355
  %1357 = vmatmul.f32.gmra.mxu0 %v1330
  %v1358 = vpop.f32.mrf.mxu0
  %v1359 = vadd.f32 %v1325, %v1358
  %1360 = vmatmul.f32.gmra.mxu0 %v1333
  %v1361 = vpop.f32.mrf.mxu0
  %v1362 = vadd.f32 %v1325, %v1361
  %1363 = vmatmul.f32.gmra.mxu0 %v1336
  %v1364 = vpop.f32.mrf.mxu0
  %v1365 = vadd.f32 %v1325, %v1364
  %1366 = vdwg.mxu0
  %v1367 = vmax.f32 %v1356, 0.0
  %v1368 = vmax.f32 %v1359, 0.0
  %v1369 = vmax.f32 %v1362, 0.0
  %v1370 = vmax.f32 %v1365, 0.0
  %v1371 = vld [vmem:[%s4] sm:$0xff]
  %v1372 = vld [vmem:[%s4 + $0x8] sm:$0xff]
  %v1373 = vld [vmem:[%s4 + $0x10] sm:$0xff]
  %v1374 = vld [vmem:[%s4 + $0x18] sm:$0xff]
  %v1375 = vld [vmem:[%s4 + $0x20] sm:$0xff]
  %v1376 = vld [vmem:[%s4 + $0x28] sm:$0xff]
  %v1377 = vld [vmem:[%s4 + $0x30] sm:$0xff]
  %v1378 = vld [vmem:[%s4 + $0x38] sm:$0xff]
  %v1380 = vsel %vm165, %v1367, 0
  %v1383 = vsel %vm165, %v1368, 0
  %v1386 = vsel %vm165, %v1369, 0
  %v1389 = vsel %vm165, %v1370, 0
  %1391 = vmatpush.msra.mxu0 0.0
  %1392 = vmatpush.msra.mxu0 0.0
  %1393 = vmatpush.msra.mxu0 0.0
  %1394 = vmatpush.msra.mxu0 0.0
  %1395 = vmatpush.msra.mxu0 0.0
  %1396 = vmatpush.msra.mxu0 0.0
  %1397 = vmatpush.msra.mxu0 0.0
  %1398 = vmatpush.msra.mxu0 0.0
  %1399 = vmatpush.msra.mxu0 0.0
  %1400 = vmatpush.msra.mxu0 0.0
  %1401 = vmatpush.msra.mxu0 0.0
  %1402 = vmatpush.msra.mxu0 0.0
  %1403 = vmatpush.msra.mxu0 %v1377
  %1404 = vmatpush.msra.mxu0 %v1375
  %1405 = vmatpush.msra.mxu0 %v1373
  %1406 = vmatpush.msra.mxu0 %v1371
  %1407 = vmatmul.f32.gmra.mxu0 %v1380
  %v1408 = vpop.f32.mrf.mxu0
  %v1409 = vadd.f32 0.0, %v1408
  %1410 = vmatmul.f32.gmra.mxu0 %v1383
  %v1411 = vpop.f32.mrf.mxu0
  %v1412 = vadd.f32 0.0, %v1411
  %1413 = vmatmul.f32.gmra.mxu0 %v1386
  %v1414 = vpop.f32.mrf.mxu0
  %v1415 = vadd.f32 0.0, %v1414
  %1416 = vmatmul.f32.gmra.mxu0 %v1389
  %v1417 = vpop.f32.mrf.mxu0
  %v1418 = vadd.f32 0.0, %v1417
  %1419 = vdwg.mxu0
  %1420 = vmatpush.msra.mxu0 0.0
  %1421 = vmatpush.msra.mxu0 0.0
  %1422 = vmatpush.msra.mxu0 0.0
  %1423 = vmatpush.msra.mxu0 0.0
  %1424 = vmatpush.msra.mxu0 0.0
  %1425 = vmatpush.msra.mxu0 0.0
  %1426 = vmatpush.msra.mxu0 0.0
  %1427 = vmatpush.msra.mxu0 0.0
  %1428 = vmatpush.msra.mxu0 0.0
  %1429 = vmatpush.msra.mxu0 0.0
  %1430 = vmatpush.msra.mxu0 0.0
  %1431 = vmatpush.msra.mxu0 0.0
  %1432 = vmatpush.msra.mxu0 %v1378
  %1433 = vmatpush.msra.mxu0 %v1376
  %1434 = vmatpush.msra.mxu0 %v1374
  %1435 = vmatpush.msra.mxu0 %v1372
  %1436 = vmatmul.f32.gmra.mxu0 %v1380
  %v1437 = vpop.f32.mrf.mxu0
  %v1438 = vadd.f32 0.0, %v1437
  %1439 = vmatmul.f32.gmra.mxu0 %v1383
  %v1440 = vpop.f32.mrf.mxu0
  %v1441 = vadd.f32 0.0, %v1440
  %1442 = vmatmul.f32.gmra.mxu0 %v1386
  %v1443 = vpop.f32.mrf.mxu0
  %v1444 = vadd.f32 0.0, %v1443
  %1445 = vmatmul.f32.gmra.mxu0 %v1389
  %v1446 = vpop.f32.mrf.mxu0
  %v1447 = vadd.f32 0.0, %v1446
  %1448 = vdwg.mxu0
  %v1449 = vld [vmem:[%s1 + $0xb0] sm:$0x3]
  %v1450 = vld [vmem:[%s4 + $0x40] sm:$0xff]
  %v1451 = vld [vmem:[%s4 + $0x48] sm:$0xff]
  %v1452 = vld [vmem:[%s4 + $0x50] sm:$0xff]
  %v1453 = vld [vmem:[%s4 + $0x58] sm:$0xff]
  %v1454 = vld [vmem:[%s4 + $0x60] sm:$0xff]
  %v1455 = vld [vmem:[%s4 + $0x68] sm:$0xff]
  %v1456 = vld [vmem:[%s4 + $0x70] sm:$0xff]
  %v1457 = vld [vmem:[%s4 + $0x78] sm:$0xff]
  %v1458 = vmul.f32 %v1409, %v1450
  %v1459 = vmul.f32 %v1438, %v1451
  %v1460 = vmul.f32 %v1412, %v1452
  %v1461 = vmul.f32 %v1441, %v1453
  %v1462 = vmul.f32 %v1415, %v1454
  %v1463 = vmul.f32 %v1444, %v1455
  %v1464 = vmul.f32 %v1418, %v1456
  %v1465 = vmul.f32 %v1447, %v1457
  %v1467 = vsel %vm165, %v1449, 0
  %1469 = vmatpush.msra.mxu0 0.0
  %1470 = vmatpush.msra.mxu0 0.0
  %1471 = vmatpush.msra.mxu0 0.0
  %1472 = vmatpush.msra.mxu0 0.0
  %1473 = vmatpush.msra.mxu0 0.0
  %1474 = vmatpush.msra.mxu0 0.0
  %1475 = vmatpush.msra.mxu0 0.0
  %1476 = vmatpush.msra.mxu0 0.0
  %1477 = vmatpush.msra.mxu0 0.0
  %1478 = vmatpush.msra.mxu0 0.0
  %1479 = vmatpush.msra.mxu0 0.0
  %1480 = vmatpush.msra.mxu0 0.0
  %1481 = vmatpush.msra.mxu0 %v1464
  %1482 = vmatpush.msra.mxu0 %v1462
  %1483 = vmatpush.msra.mxu0 %v1460
  %1484 = vmatpush.msra.mxu0 %v1458
  %1485 = vmatmul.f32.gmra.mxu0 %v1467
  %v1486 = vpop.f32.mrf.mxu0
  %v1487 = vadd.f32 0.0, %v1486
  %1488 = vdwg.mxu0
  %1489 = vmatpush.msra.mxu0 0.0
  %1490 = vmatpush.msra.mxu0 0.0
  %1491 = vmatpush.msra.mxu0 0.0
  %1492 = vmatpush.msra.mxu0 0.0
  %1493 = vmatpush.msra.mxu0 0.0
  %1494 = vmatpush.msra.mxu0 0.0
  %1495 = vmatpush.msra.mxu0 0.0
  %1496 = vmatpush.msra.mxu0 0.0
  %1497 = vmatpush.msra.mxu0 0.0
  %1498 = vmatpush.msra.mxu0 0.0
  %1499 = vmatpush.msra.mxu0 0.0
  %1500 = vmatpush.msra.mxu0 0.0
  %1501 = vmatpush.msra.mxu0 %v1465
  %1502 = vmatpush.msra.mxu0 %v1463
  %1503 = vmatpush.msra.mxu0 %v1461
  %1504 = vmatpush.msra.mxu0 %v1459
  %1505 = vmatmul.f32.gmra.mxu0 %v1467
  %v1506 = vpop.f32.mrf.mxu0
  %v1507 = vadd.f32 0.0, %v1506
  %1508 = vdwg.mxu0
  %v1509 = vld [vmem:[%s3 + $0x28] sm:$0xff]
  %v1510 = vld [vmem:[%s3 + $0x30] sm:$0xff]
  %v1511 = vld [vmem:[%s3 + $0x38] sm:$0xff]
  %v1512 = vld [vmem:[%s3 + $0x40] sm:$0xff]
  %v1513 = vld [vmem:[%s3 + $0x48] sm:$0xff]
  %v1514 = vld [vmem:[%s3 + $0x50] sm:$0xff]
  %v1515 = vld [vmem:[%s3 + $0x58] sm:$0xff]
  %v1516 = vld [vmem:[%s3 + $0x60] sm:$0xff]
  %v1517 = vld [vmem:[%s3 + $0x68] sm:$0xff]
  %v1518 = vld [vmem:[%s3 + $0x70] sm:$0xff]
  %v1519 = vld [vmem:[%s3 + $0x78] sm:$0xff]
  %v1520 = vld [vmem:[%s3 + $0x80] sm:$0xff]
  %v1521 = vld [vmem:[%s3 + $0x88] sm:$0xff]
  %v1522 = vld [vmem:[%s3 + $0x90] sm:$0xff]
  %v1523 = vld [vmem:[%s3 + $0x98] sm:$0xff]
  %v1524 = vld [vmem:[%s3 + $0xa0] sm:$0xff]
  %v1525 = vld [vmem:[%s3 + $0xa8] sm:$0xff]
  %v1526 = vld [vmem:[%s3 + $0xb0] sm:$0xff]
  %v1527 = vld [vmem:[%s3 + $0xb8] sm:$0xff]
  %v1528 = vld [vmem:[%s3 + $0xc0] sm:$0xff]
  %v1529 = vld [vmem:[%s3 + $0xc8] sm:$0xff]
  %v1530 = vld [vmem:[%s3 + $0xd0] sm:$0xff]
  %v1531 = vld [vmem:[%s3 + $0xd8] sm:$0xff]
  %v1532 = vld [vmem:[%s3 + $0xe0] sm:$0xff]
  %v1533 = vld [vmem:[%s3 + $0xe8] sm:$0xff]
  %v1534 = vld [vmem:[%s3 + $0xf0] sm:$0xff]
  %v1535 = vld [vmem:[%s3 + $0xf8] sm:$0xff]
  %v1536 = vld [vmem:[%s3 + $0x100] sm:$0xff]
  %v1537 = vld [vmem:[%s3 + $0x108] sm:$0xff]
  %v1538 = vld [vmem:[%s3 + $0x110] sm:$0xff]
  %v1539 = vld [vmem:[%s3 + $0x118] sm:$0xff]
  %v1540 = vld [vmem:[%s3 + $0x120] sm:$0xff]
  %v1541 = vld [vmem:[%s3 + $0x128] sm:$0x1]
  %v1542 = vperm.slane %v1541, 0
  %1543 = vmatpush.msra.mxu0 %v1524
  %1544 = vmatpush.msra.mxu0 %v1523
  %1545 = vmatpush.msra.mxu0 %v1522
  %1546 = vmatpush.msra.mxu0 %v1521
  %1547 = vmatpush.msra.mxu0 %v1520
  %1548 = vmatpush.msra.mxu0 %v1519
  %1549 = vmatpush.msra.mxu0 %v1518
  %1550 = vmatpush.msra.mxu0 %v1517
  %1551 = vmatpush.msra.mxu0 %v1516
  %1552 = vmatpush.msra.mxu0 %v1515
  %1553 = vmatpush.msra.mxu0 %v1514
  %1554 = vmatpush.msra.mxu0 %v1513
  %1555 = vmatpush.msra.mxu0 %v1512
  %1556 = vmatpush.msra.mxu0 %v1511
  %1557 = vmatpush.msra.mxu0 %v1510
  %1558 = vmatpush.msra.mxu0 %v1509
  %1559 = vmatmul.f32.gmra.mxu0 %v1487
  %v1560 = vpop.f32.mrf.mxu0
  %v1561 = vadd.f32 %v1542, %v1560
  %1562 = vdwg.mxu0
  %1563 = vmatpush.msra.mxu0 %v1540
  %1564 = vmatpush.msra.mxu0 %v1539
  %1565 = vmatpush.msra.mxu0 %v1538
  %1566 = vmatpush.msra.mxu0 %v1537
  %1567 = vmatpush.msra.mxu0 %v1536
  %1568 = vmatpush.msra.mxu0 %v1535
  %1569 = vmatpush.msra.mxu0 %v1534
  %1570 = vmatpush.msra.mxu0 %v1533
  %1571 = vmatpush.msra.mxu0 %v1532
  %1572 = vmatpush.msra.mxu0 %v1531
  %1573 = vmatpush.msra.mxu0 %v1530
  %1574 = vmatpush.msra.mxu0 %v1529
  %1575 = vmatpush.msra.mxu0 %v1528
  %1576 = vmatpush.msra.mxu0 %v1527
  %1577 = vmatpush.msra.mxu0 %v1526
  %1578 = vmatpush.msra.mxu0 %v1525
  %1579 = vmatmul.f32.gmra.mxu0 %v1507
  %v1580 = vpop.f32.mrf.mxu0
  %v1581 = vadd.f32 %v1561, %v1580
  %1582 = vdwg.mxu0
  %v1583 = vmax.f32 %v1581, 0.0
  %v1584 = vld [vmem:[%s3 + $0x130] sm:$0xff]
  %v1585 = vld [vmem:[%s3 + $0x138] sm:$0xff]
  %v1586 = vld [vmem:[%s3 + $0x140] sm:$0x1]
  %v1587 = vperm.slane %v1586, 0
  %v1589 = vsel %vm1168, %v1583, 0
  %1591 = vmatpush.msra.mxu0 0.0
  %1592 = vmatpush.msra.mxu0 0.0
  %1593 = vmatpush.msra.mxu0 0.0
  %1594 = vmatpush.msra.mxu0 0.0
  %1595 = vmatpush.msra.mxu0 0.0
  %1596 = vmatpush.msra.mxu0 0.0
  %1597 = vmatpush.msra.mxu0 0.0
  %1598 = vmatpush.msra.mxu0 0.0
  %1599 = vmatpush.msra.mxu0 0.0
  %1600 = vmatpush.msra.mxu0 0.0
  %1601 = vmatpush.msra.mxu0 0.0
  %1602 = vmatpush.msra.mxu0 0.0
  %1603 = vmatpush.msra.mxu0 0.0
  %1604 = vmatpush.msra.mxu0 0.0
  %1605 = vmatpush.msra.mxu0 %v1585
  %1606 = vmatpush.msra.mxu0 %v1584
  %1607 = vmatmul.f32.gmra.mxu0 %v1589
  %v1608 = vpop.f32.mrf.mxu0
  %v1609 = vadd.f32 %v1587, %v1608
  %1610 = vdwg.mxu0
  %v1611 = vsub.f32 0.0, %v1609
  %v1612 = vmul.f32 %v1611, 1.442695
  %v1613 = vpow.pop %v1612
  %v1614 = vadd.f32 %v1613, 1.0
  %v1615 = vrcp.pop %v1614
  %v1616 = vmul.f32 %v1614, %v1615
  %v1617 = vsub.f32 1.0, %v1616
  %v1618 = vmul.f32 %v1615, %v1617
  %v1619 = vadd.f32 %v1615, %v1618
  %vm1620 = vweird.f32 %v1614
  %vm1621 = vweird.f32 %v1615
  %vm1622 = vmor %vm1620, %vm1621
  %v1623 = vsel %vm1622, %v1615, %v1619
  %v1624 = vand.u32 2147483647, %v1614
  %vm1625 = vcmp.eq.f32.partialorder %v1624, 8.507059e+37
  %v1626 = vand.u32 %v1614, 2147483648
  %v1627 = vor.u32 1.1754944e-38, %v1626
  %v1628 = vsel %vm1625, %v1627, %v1623
  %v1629 = vmul.f32 1.0, %v1628
  %vm1630 = vcmask 1024
  %1631 = vst.msk [vmem:[%s5] sm:$0x3] %vm1630, %v1629
  // Predicated region
  $region22: #{tfeq_forward.1} parent=0 // pred_check
    _
  $region23: #{tfeq_forward.1} parent=0 // pred_check_branch
    %1633 = sbr.rel (0) target = $region25
  $region24: #{tfeq_forward.1} parent=0 // pred_region
    _
  $region25: #{tfeq_forward.1} parent=0 // pred_fallthru
    _
  // Predicated region
  $region26: #{tfeq_forward.1} parent=0 // pred_check
    _
  $region27: #{tfeq_forward.1} parent=0 // pred_check_branch
    %1635 = sbr.rel (0) target = $region29
  $region28: #{tfeq_forward.1} parent=0 // pred_region
    _
  $region29: #{tfeq_forward.1} parent=0 // pred_fallthru
    _

</llo_original>
